<compile_context>
chip_gen: v7x
topology: tpu7x:2x2x1
jax: 0.10.0
libtpu: 0.0.40
codegen_flags: <defaults>
</compile_context>

<pallas_src>
import functools

import jax
import jax.numpy as jnp
from jax import lax
from jax.experimental import pallas as pl
from jax.experimental.pallas import tpu as pltpu

_LANE = 128          # D-chunk size == lane width
_INV_TEMP = 1.0 / 0.07


def _round_up(n, m):
    return ((n + m - 1) // m) * m


def _action_logits_kernel(x_ref, t_ref, o_ref, *, k_actual, chunk):
    # x_ref: (TB, Dp), t_ref: (TB, K, Dp), o_ref: (TB, KP) with KP multiple of 128.
    TB, K, Dp = t_ref.shape
    KP = o_ref.shape[-1]
    nc = Dp // chunk

    def body(c, carry):
        dot_acc, tsq_acc, xsq_acc = carry
        off = pl.multiple_of(c * chunk, chunk)
        xc = x_ref[:, pl.ds(off, chunk)]          # (TB, chunk)
        tc = t_ref[:, :, pl.ds(off, chunk)]       # (TB, K, chunk)
        # Upcast only if inputs are sub-f32 (bf16 inputs stay bf16 in HBM;
        # all in-kernel math is f32 — required on v5e, harmless elsewhere).
        if xc.dtype != jnp.float32:
            xc = xc.astype(jnp.float32)
        if tc.dtype != jnp.float32:
            tc = tc.astype(jnp.float32)
        # VPU chunk-accumulation; the single XLU lane-reduce happens after the loop.
        dot_acc = dot_acc + xc[:, None, :] * tc
        tsq_acc = tsq_acc + tc * tc
        xsq_acc = xsq_acc + xc * xc
        return dot_acc, tsq_acc, xsq_acc

    init = (jnp.zeros((TB, K, chunk), jnp.float32),
            jnp.zeros((TB, K, chunk), jnp.float32),
            jnp.zeros((TB, chunk), jnp.float32))
    dot_acc, tsq_acc, xsq_acc = lax.fori_loop(0, nc, body, init, unroll=True)

    dot = jnp.sum(dot_acc, axis=-1)                    # (TB, K)
    t_sq = jnp.sum(tsq_acc, axis=-1)                   # (TB, K)
    x_sq = jnp.sum(xsq_acc, axis=-1, keepdims=True)    # (TB, 1)

    # No epsilon, to match torch's x / x.norm(...) exactly; two rsqrts (EUP)
    # instead of rsqrt(product) for overflow/underflow safety.
    scale = lax.rsqrt(x_sq) * lax.rsqrt(t_sq) * _INV_TEMP
    logits = (dot * scale).astype(o_ref.dtype)

    if KP == k_actual:
        o_ref[...] = logits
    else:
        # Lane-padded output block: dense 128-lane writeback; pad lanes are zero.
        o_ref[...] = jnp.zeros_like(o_ref)
        o_ref[:, :k_actual] = logits


def _pick_batch_tile(b8, k, dp, kp, in_itemsize, vmem_budget_bytes):
    """Largest sublane-aligned batch tile whose VMEM footprint fits the budget."""
    # Per-row bytes:
    #   double-buffered input blocks (text + x) at the *input* dtype width,
    #   double-buffered f32 output block (lane-padded to kp),
    #   in-kernel f32 working set with D chunked to _LANE lanes
    #   (~4 live (k, _LANE) slabs: 2 accumulators + upcast chunk + mul temp).
    io_bytes = 2 * (k * dp + dp) * in_itemsize + 2 * kp * 4
    work_bytes = (4 * k * _LANE + 4 * _LANE) * 4
    per_row = io_bytes + work_bytes
    cap = max(8, (vmem_budget_bytes // per_row) // 8 * 8)
    tile = min(cap, b8)
    # Keep >= 2 grid steps when the batch allows so both TensorCores get work
    # on 2-TC chips (v7x); on 1-TC chips the extra grid step is ~0.35 us noise.
    if tile >= b8 and b8 >= 16:
        tile = _round_up(pl.cdiv(b8, 2), 8)
    return tile


def roi_action_head_logits(x, text_features, *, batch_tile=None,
                           vmem_budget_bytes=24 * 1024 * 1024,
                           vmem_limit_bytes=None):
    """x: [B, D], text_features: [B, K, D] -> action logits [B, K] float32."""
    B, D = x.shape
    Bt, K, Dt = text_features.shape
    assert B == Bt and D == Dt

    in_itemsize = jnp.dtype(text_features.dtype).itemsize
    Dp = _round_up(D, _LANE)         # zero-pad D: does not change dot / x_sq / t_sq
    KP = _round_up(K, _LANE)         # lane-dense output, sliced back to K below
    B8 = _round_up(B, 8)

    if batch_tile is None:
        batch_tile = _pick_batch_tile(B8, K, Dp, KP, in_itemsize, vmem_budget_bytes)
    batch_tile = _round_up(min(batch_tile, B8), 8)
    B_pad = _round_up(B8, batch_tile)
    if vmem_limit_bytes is None:
        vmem_limit_bytes = vmem_budget_bytes + 8 * 1024 * 1024

    if (B_pad, Dp) != (B, D):
        x = jnp.pad(x, ((0, B_pad - B), (0, Dp - D)))
        text_features = jnp.pad(text_features, ((0, B_pad - B), (0, 0), (0, Dp - D)))

    grid = (B_pad // batch_tile,)
    kernel = functools.partial(_action_logits_kernel, k_actual=K, chunk=_LANE)

    out = pl.pallas_call(
        kernel,
        out_shape=jax.ShapeDtypeStruct((B_pad, KP), jnp.float32),
        grid_spec=pltpu.PrefetchScalarGridSpec(
            num_scalar_prefetch=0,
            grid=grid,
            in_specs=[
                pl.BlockSpec((batch_tile, Dp), lambda b: (b, 0)),
                pl.BlockSpec((batch_tile, K, Dp), lambda b: (b, 0, 0)),
            ],
            out_specs=pl.BlockSpec((batch_tile, KP), lambda b: (b, 0)),
        ),
        compiler_params=pltpu.CompilerParams(
            dimension_semantics=("parallel",),
            vmem_limit_bytes=vmem_limit_bytes),
        cost_estimate=pl.CostEstimate(
            flops=4 * B * K * D,
            transcendentals=B * (K + 1),
            bytes_accessed=(B * K * D + B * D) * in_itemsize + B * K * 4),
    )(x, text_features)

    return out[:B, :K]


def _reference(x, text_features):
    xn = x / jnp.linalg.norm(x, axis=-1, keepdims=True)
    tn = text_features / jnp.linalg.norm(text_features, axis=-1, keepdims=True)
    return jnp.einsum('bd,bkd->bk', xn, tn) / 0.07


if __name__ == "__main__":
    # Small shapes consistent with the module: B proposals, K=21 JHMDB action
    # classes, D=200 embedding dim (stand-in for CLIP's 512; exercises both
    # D-padding to 256 and the two-chunk reduction, plus batch padding 18->32).
    B, K, D = 18, 21, 200
    key = jax.random.PRNGKey(0)
    kx, kt = jax.random.split(key)
    x = jax.random.normal(kx, (B, D), dtype=jnp.float32)
    text_features = jax.random.normal(kt, (B, K, D), dtype=jnp.float32)

    logits = roi_action_head_logits(x, text_features)
    logits = jax.block_until_ready(logits)

    ref = _reference(x, text_features)
    assert logits.shape == (B, K)
    assert jnp.allclose(logits, ref, atol=2e-3, rtol=2e-3), float(
        jnp.max(jnp.abs(logits - ref)))

    print("KERNEL_OK")
</pallas_src>

<mosaic_0001>
module attributes {stable_mosaic.version = 11 : i64} {
  func.func @_action_logits_kernel(%arg0: i32, %arg1: memref<16x256xf32, #tpu.memory_space<vmem>>, %arg2: memref<16x21x256xf32, #tpu.memory_space<vmem>>, %arg3: memref<16x128xf32, #tpu.memory_space<vmem>>) attributes {dimension_semantics = [#tpu.dimension_semantics<parallel>], iteration_bounds = array<i64: 2>, scalar_prefetch = 0 : i64, scratch_operands = 0 : i64, tpu.core_type = #tpu.core_type<tc>, window_params = [{transform_indices = @transform_0, window_bounds = array<i64: 16, 256>}, {transform_indices = @transform_1, window_bounds = array<i64: 16, 21, 256>}, {transform_indices = @transform_2, window_bounds = array<i64: 16, 128>}]} {
    %cst = arith.constant 0.000000e+00 : f32
    %0 = vector.broadcast %cst : f32 to vector<16x21x128xf32>
    %cst_0 = arith.constant 0.000000e+00 : f32
    %1 = vector.broadcast %cst_0 : f32 to vector<16x21x128xf32>
    %cst_1 = arith.constant 0.000000e+00 : f32
    %2 = vector.broadcast %cst_1 : f32 to vector<16x128xf32>
    %c0_i32 = arith.constant 0 : i32
    %c128_i32 = arith.constant 128 : i32
    %3 = arith.muli %c0_i32, %c128_i32 : i32
    %4 = tpu.assume_multiple %3, 128 : i32
    %c0 = arith.constant 0 : index
    %5 = arith.index_cast %4 : i32 to index
    %6 = vector.load %arg1[%c0, %5] : memref<16x256xf32, #tpu.memory_space<vmem>>, vector<16x128xf32>
    %c0_2 = arith.constant 0 : index
    %c0_3 = arith.constant 0 : index
    %7 = arith.index_cast %4 : i32 to index
    %8 = vector.load %arg2[%c0_2, %c0_3, %7] : memref<16x21x256xf32, #tpu.memory_space<vmem>>, vector<16x21x128xf32>
    %9 = vector.shape_cast %6 : vector<16x128xf32> to vector<16x1x128xf32>
    %10 = vector.broadcast %9 : vector<16x1x128xf32> to vector<16x21x128xf32>
    %11 = arith.mulf %10, %8 : vector<16x21x128xf32>
    %12 = arith.addf %0, %11 : vector<16x21x128xf32>
    %13 = arith.mulf %8, %8 : vector<16x21x128xf32>
    %14 = arith.addf %1, %13 : vector<16x21x128xf32>
    %15 = arith.mulf %6, %6 : vector<16x128xf32>
    %16 = arith.addf %2, %15 : vector<16x128xf32>
    %c1_i32 = arith.constant 1 : i32
    %c128_i32_4 = arith.constant 128 : i32
    %17 = arith.muli %c1_i32, %c128_i32_4 : i32
    %18 = tpu.assume_multiple %17, 128 : i32
    %c0_5 = arith.constant 0 : index
    %19 = arith.index_cast %18 : i32 to index
    %20 = vector.load %arg1[%c0_5, %19] : memref<16x256xf32, #tpu.memory_space<vmem>>, vector<16x128xf32>
    %c0_6 = arith.constant 0 : index
    %c0_7 = arith.constant 0 : index
    %21 = arith.index_cast %18 : i32 to index
    %22 = vector.load %arg2[%c0_6, %c0_7, %21] : memref<16x21x256xf32, #tpu.memory_space<vmem>>, vector<16x21x128xf32>
    %23 = vector.shape_cast %20 : vector<16x128xf32> to vector<16x1x128xf32>
    %24 = vector.broadcast %23 : vector<16x1x128xf32> to vector<16x21x128xf32>
    %25 = arith.mulf %24, %22 : vector<16x21x128xf32>
    %26 = arith.addf %12, %25 : vector<16x21x128xf32>
    %27 = arith.mulf %22, %22 : vector<16x21x128xf32>
    %28 = arith.addf %14, %27 : vector<16x21x128xf32>
    %29 = arith.mulf %20, %20 : vector<16x128xf32>
    %30 = arith.addf %16, %29 : vector<16x128xf32>
    %c2_i32 = arith.constant 2 : i32
    %cst_8 = arith.constant dense<0.000000e+00> : vector<16x21xf32>
    %31 = vector.multi_reduction <add>, %26, %cst_8 [2] : vector<16x21x128xf32> to vector<16x21xf32>
    %cst_9 = arith.constant dense<0.000000e+00> : vector<16x21xf32>
    %32 = vector.multi_reduction <add>, %28, %cst_9 [2] : vector<16x21x128xf32> to vector<16x21xf32>
    %cst_10 = arith.constant dense<0.000000e+00> : vector<16xf32>
    %33 = vector.multi_reduction <add>, %30, %cst_10 [1] : vector<16x128xf32> to vector<16xf32>
    %34 = vector.shape_cast %33 : vector<16xf32> to vector<16x1xf32>
    %35 = math.rsqrt %34 : vector<16x1xf32>
    %36 = math.rsqrt %32 : vector<16x21xf32>
    %37 = vector.broadcast %35 : vector<16x1xf32> to vector<16x21xf32>
    %38 = arith.mulf %37, %36 : vector<16x21xf32>
    %cst_11 = arith.constant 14.2857141 : f32
    %39 = vector.broadcast %cst_11 : f32 to vector<16x21xf32>
    %40 = arith.mulf %38, %39 : vector<16x21xf32>
    %41 = arith.mulf %31, %40 : vector<16x21xf32>
    %cst_12 = arith.constant 0.000000e+00 : f32
    %42 = vector.broadcast %cst_12 : f32 to vector<16x128xf32>
    %c0_13 = arith.constant 0 : index
    %c0_14 = arith.constant 0 : index
    %43 = vector.load %arg3[%c0_13, %c0_14] : memref<16x128xf32, #tpu.memory_space<vmem>>, vector<16x128xf32>
    tpu.vector_store %arg3[%c0_13, %c0_14], %42 {strides = array<i32>} : memref<16x128xf32, #tpu.memory_space<vmem>>, vector<16x128xf32>,
    %c0_15 = arith.constant 0 : index
    %c0_16 = arith.constant 0 : index
    %44 = vector.load %arg3[%c0_15, %c0_16] : memref<16x128xf32, #tpu.memory_space<vmem>>, vector<16x21xf32>
    tpu.vector_store %arg3[%c0_15, %c0_16], %41 {strides = array<i32>} : memref<16x128xf32, #tpu.memory_space<vmem>>, vector<16x21xf32>,
    return
  }
  func.func @transform_0(%arg0: i32) -> (i32, i32) {
    %c0_i32 = arith.constant 0 : i32
    %c0_i32_0 = arith.constant 0 : i32
    return %arg0, %c0_i32 : i32, i32
  }
  func.func @transform_1(%arg0: i32) -> (i32, i32, i32) {
    %c0_i32 = arith.constant 0 : i32
    %c0_i32_0 = arith.constant 0 : i32
    %c0_i32_1 = arith.constant 0 : i32
    return %arg0, %c0_i32, %c0_i32_0 : i32, i32, i32
  }
  func.func @transform_2(%arg0: i32) -> (i32, i32) {
    %c0_i32 = arith.constant 0 : i32
    %c0_i32_0 = arith.constant 0 : i32
    return %arg0, %c0_i32 : i32, i32
  }
}

</mosaic_0001>

<llo_original>
// kernel: tpu_custom_call.1
$region0: #{tpu_custom_call.1}
  #allocation0 [shape = 'u32[]', space=smem, size = 0x4, offset = 0x4, fixed_abs, tag = 'smem constant byte address 0x4 - core index']
  #allocation1 [shape = 'u32[144,128]{1,0:T(1,128)}', space=vmem, size = 0x12000, scoped, tag = 'internal scratch']
  %s0 = inlined_call_operand.vmem [shape: f32[32,256], index: 0, kind: input, shape index: {}]
  %s1 = inlined_call_operand.vmem [shape: f32[32,21,256], index: 1, kind: input, shape index: {}]
  %s2 = inlined_call_operand.hbm [shape: f32[32,128], index: 2, kind: output, shape index: {}]
  %s3 = sld [smem:[#allocation0]]
  $region41: #{tpu_custom_call.1} parent=0
    _
  %s5 = ssub.s32 1, %s3
  %s6 = scalar_select 0, %s5, %s3
  $region1: #{tpu_custom_call.1} parent=0
    #allocation2 [shape = 'u8[16384]{0}', space=vmem, size = 0x4000, scoped, tag = 'output window, operand 0']
    #allocation3 [shape = 's32[2]{0}', space=sflag, size = 0x8, scoped, tag = 'scoped memory for tpu_custom_call.1']
    %7 = vsyncpa [#allocation3], 0
    %s8 = scalar_lea.sflag [#allocation3], 1
    %9 = vsyncpa %s8, 0
    loop: start=0, step=1, limit=4
    $region2: #{tpu_custom_call.1} parent=1 // loop_pre_header
      _
    $region3: #{tpu_custom_call.1} parent=1 // loop_header
      %s11 = sphi 0, %s15
      %p12 = scmp.ge.s32.totalorder %s11, 4
      %s21 = sphi 0, %s23
      %s24 = sphi 0, %s21
      %s25 = sphi 0, %s24
      %s41 = sphi 0, %s25
      %s47 = sphi 0, %s49
      %s50 = sphi 0, %s47
      %s51 = sphi 0, %s50
      %s67 = sphi 0, %s51
      %s73 = sphi 0, %s75
      %s76 = sphi 0, %s73
      %s77 = sphi 0, %s76
      %s93 = sphi 0, %s77
    $region4: #{tpu_custom_call.1} parent=1 // loop_header_branch
      %14 = sbr.rel (%p12) target = $region8
    $region5: #{tpu_custom_call.1} parent=1 // loop_body
      %s16 = ssub.s32 %s11, 1
      %s17 = ssub.s32 %s11, 2
      %s18 = sadd.s32 %s11, 1
      %s19 = ssub.s32 %s11, %s18
      %p20 = scmp.eq.s32.totalorder %s19, 0
      %s22 = sadd.s32 %s21, 1
      %s23 = scalar_select %p20, %s21, %s22
      %p26 = pneg %p20
      %p27 = scmp.eq.s32.totalorder %s11, 1
      %p28 = por %p26, %p27
      %p29 = scmp.ne.s32.totalorder %s21, %s24
      %p30 = scmp.eq.s32.totalorder %s11, 0
      %p31 = por %p29, %p30
      %p32 = scmp.ne.s32.totalorder %s21, %s24
      %p33 = scmp.eq.s32.totalorder %s16, 1
      %p34 = por %p32, %p33
      %p35 = scmp.ne.s32.totalorder %s24, %s25
      %p36 = scmp.eq.s32.totalorder %s16, 0
      %p37 = por %p35, %p36
      %p38 = scmp.ne.s32.totalorder %s24, %s25
      %p39 = scmp.eq.s32.totalorder %s17, 1
      %p40 = por %p38, %p39
      %p42 = scmp.ne.s32.totalorder %s25, %s41
      %p43 = scmp.eq.s32.totalorder %s17, 0
      %p44 = por %p42, %p43
      %s45 = ssub.s32 %s11, %s18
      %p46 = scmp.eq.s32.totalorder %s45, 0
      %s48 = sadd.s32 %s47, 1
      %s49 = scalar_select %p46, %s47, %s48
      %p52 = pneg %p46
      %p53 = scmp.eq.s32.totalorder %s11, 1
      %p54 = por %p52, %p53
      %p55 = scmp.ne.s32.totalorder %s47, %s50
      %p56 = scmp.eq.s32.totalorder %s11, 0
      %p57 = por %p55, %p56
      %p58 = scmp.ne.s32.totalorder %s47, %s50
      %p59 = scmp.eq.s32.totalorder %s16, 1
      %p60 = por %p58, %p59
      %p61 = scmp.ne.s32.totalorder %s50, %s51
      %p62 = scmp.eq.s32.totalorder %s16, 0
      %p63 = por %p61, %p62
      %p64 = scmp.ne.s32.totalorder %s50, %s51
      %p65 = scmp.eq.s32.totalorder %s17, 1
      %p66 = por %p64, %p65
      %p68 = scmp.ne.s32.totalorder %s51, %s67
      %p69 = scmp.eq.s32.totalorder %s17, 0
      %p70 = por %p68, %p69
      %s71 = ssub.s32 %s11, %s18
      %p72 = scmp.eq.s32.totalorder %s71, 0
      %s74 = sadd.s32 %s73, 1
      %s75 = scalar_select %p72, %s73, %s74
      %p78 = pneg %p72
      %p79 = scmp.eq.s32.totalorder %s11, 1
      %p80 = por %p78, %p79
      %p81 = scmp.ne.s32.totalorder %s73, %s76
      %p82 = scmp.eq.s32.totalorder %s11, 0
      %p83 = por %p81, %p82
      %p84 = scmp.ne.s32.totalorder %s73, %s76
      %p85 = scmp.eq.s32.totalorder %s16, 1
      %p86 = por %p84, %p85
      %p87 = scmp.ne.s32.totalorder %s76, %s77
      %p88 = scmp.eq.s32.totalorder %s16, 0
      %p89 = por %p87, %p88
      %p90 = scmp.ne.s32.totalorder %s76, %s77
      %p91 = scmp.eq.s32.totalorder %s17, 1
      %p92 = por %p90, %p91
      %p94 = scmp.ne.s32.totalorder %s77, %s93
      %p95 = scmp.eq.s32.totalorder %s17, 0
      %p96 = por %p94, %p95
      %p97 = scmp.le.s32.totalorder 1, %s11
      %p98 = scmp.lt.s32.totalorder %s11, 3
      %p99 = pnand %p97, %p98
      %p100 = pneg %p99
      // Predicated region
      $region9: #{tpu_custom_call.1} parent=5 // pred_check
        _
      $region10: #{tpu_custom_call.1} parent=5 // pred_check_branch
        %102 = sbr.rel (%p99) target = $region12
      $region11: #{tpu_custom_call.1} parent=5 // pred_region
        %s103 = ssub.s32 %s11, 1
      $region12: #{tpu_custom_call.1} parent=5 // pred_fallthru
        _
      %p104 = scmp.lt.s32.totalorder %s11, 2
      // Predicated region
      $region13: #{tpu_custom_call.1} parent=5 // pred_check
        %p105 = pneg %p104
      $region14: #{tpu_custom_call.1} parent=5 // pred_check_branch
        %107 = sbr.rel (%p105) target = $region16
      $region15: #{tpu_custom_call.1} parent=5 // pred_region
        // Predicated region
        $region17: #{tpu_custom_call.1} parent=15 // pred_check
          %p108 = pneg %p31
        $region18: #{tpu_custom_call.1} parent=15 // pred_check_branch
          %110 = sbr.rel (%p108) target = $region20
        $region19: #{tpu_custom_call.1} parent=15 // pred_region
          %s111 = smul.u32 2, %s11
          %p112 = scmp.lt.s32.totalorder %s111, 3
          %s113 = scalar_select %p112, %s111, 3
          %s114 = smul.addr %s113, 2
          %s115 = smul.addr %s114, 8
          %s116 = scalar_lea.vmem %s0, %s115
          %s117 = smul.u32 2, %s11
        $region20: #{tpu_custom_call.1} parent=15 // pred_fallthru
          _
        // Predicated region
        $region21: #{tpu_custom_call.1} parent=15 // pred_check
          %p118 = pneg %p57
        $region22: #{tpu_custom_call.1} parent=15 // pred_check_branch
          %120 = sbr.rel (%p118) target = $region24
        $region23: #{tpu_custom_call.1} parent=15 // pred_region
          %s121 = smul.u32 16, %s11
          %p122 = scmp.lt.s32.totalorder %s121, 31
          %s123 = scalar_select %p122, %s121, 31
          %s124 = smul.addr %s123, 6
          %s125 = smul.addr %s124, 8
          %s126 = scalar_lea.vmem %s1, %s125
          %s127 = smul.u32 16, %s11
        $region24: #{tpu_custom_call.1} parent=15 // pred_fallthru
          _
      $region16: #{tpu_custom_call.1} parent=5 // pred_fallthru
        _
      %p128 = scmp.le.s32.totalorder 1, %s11
      %p129 = scmp.lt.s32.totalorder %s11, 3
      %p130 = pnand %p128, %p129
      %p131 = pneg %p130
      // Predicated region
      $region25: #{tpu_custom_call.1} parent=5 // pred_check
        _
      $region26: #{tpu_custom_call.1} parent=5 // pred_check_branch
        %133 = sbr.rel (%p130) target = $region28
      $region27: #{tpu_custom_call.1} parent=5 // pred_region
        %s134 = ssub.s32 %s11, 1
        %s135 = smul.u32 2, %s16
        %p136 = scmp.lt.s32.totalorder %s135, 3
        %s137 = scalar_select %p136, %s135, 3
        %s138 = smul.addr %s137, 2
        %s139 = smul.addr %s138, 8
        %s140 = scalar_lea.vmem %s0, %s139
        %p141 = pneg %p37
        %p142 = pneg %p34
        %s143 = smul.u32 16, %s16
        %p144 = scmp.lt.s32.totalorder %s143, 31
        %s145 = scalar_select %p144, %s143, 31
        %s146 = smul.addr %s145, 6
        %s147 = smul.addr %s146, 8
        %s148 = scalar_lea.vmem %s1, %s147
        %p149 = pneg %p63
        %p150 = pneg %p60
        %p151 = pneg %p89
        %p152 = pneg %p86
        %s153 = sand.u32 %s76, 1
        %s154 = scalar_lea.sflag [#allocation3], %s153
        %s155 = sand.u32 %s76, 1
        %s156 = smul.addr %s155, 16
        %s157 = scalar_lea.vmem [#allocation2], %s156
        %s158 = smul.u32 2, %s16
        %p159 = scmp.lt.s32.totalorder %s158, 3
        %s160 = scalar_select %p159, %s158, 3
        %s161 = smul.addr %s160, 2
        %s162 = smul.addr %s161, 8
        %s163 = scalar_lea.vmem %s0, %s162
        %s164 = smul.u32 2, %s16
        %s165 = smul.u32 16, %s16
        %p166 = scmp.lt.s32.totalorder %s165, 31
        %s167 = scalar_select %p166, %s165, 31
        %s168 = smul.addr %s167, 6
        %s169 = smul.addr %s168, 8
        %s170 = scalar_lea.vmem %s1, %s169
        %s171 = smul.u32 16, %s16
        %s172 = smul.u32 2, %s16
        %v173 = vld [vmem:[%s163] sm:$0xff]
        %v174 = vld [vmem:[%s163 + $0x10] sm:$0xff]
        %v175 = vld [vmem:[%s170] sm:$0xff]
        %v176 = vld [vmem:[%s170 + $0x10] sm:$0xff]
        %v177 = vld [vmem:[%s170 + $0x20] sm:$0x1f]
        %v178 = vld [vmem:[%s170 + $0x30] sm:$0xff]
        %v179 = vld [vmem:[%s170 + $0x40] sm:$0xff]
        %v180 = vld [vmem:[%s170 + $0x50] sm:$0x1f]
        %v181 = vld [vmem:[%s170 + $0x60] sm:$0xff]
        %v182 = vld [vmem:[%s170 + $0x70] sm:$0xff]
        %v183 = vld [vmem:[%s170 + $0x80] sm:$0x1f]
        %v184 = vld [vmem:[%s170 + $0x90] sm:$0xff]
        %v185 = vld [vmem:[%s170 + $0xa0] sm:$0xff]
        %v186 = vld [vmem:[%s170 + $0xb0] sm:$0x1f]
        %v187 = vld [vmem:[%s170 + $0xc0] sm:$0xff]
        %v188 = vld [vmem:[%s170 + $0xd0] sm:$0xff]
        %v189 = vld [vmem:[%s170 + $0xe0] sm:$0x1f]
        %v190 = vld [vmem:[%s170 + $0xf0] sm:$0xff]
        %v191 = vld [vmem:[%s170 + $0x100] sm:$0xff]
        %v192 = vld [vmem:[%s170 + $0x110] sm:$0x1f]
        %v193 = vld [vmem:[%s170 + $0x120] sm:$0xff]
        %v194 = vld [vmem:[%s170 + $0x130] sm:$0xff]
        %v195 = vld [vmem:[%s170 + $0x140] sm:$0x1f]
        %v196 = vld [vmem:[%s170 + $0x150] sm:$0xff]
        %v197 = vld [vmem:[%s170 + $0x160] sm:$0xff]
        %v198 = vld [vmem:[%s170 + $0x170] sm:$0x1f]
        %v199 = vld [vmem:[%s170 + $0x180] sm:$0xff]
        %v200 = vld [vmem:[%s170 + $0x190] sm:$0xff]
        %v201 = vld [vmem:[%s170 + $0x1a0] sm:$0x1f]
        %v202 = vld [vmem:[%s170 + $0x1b0] sm:$0xff]
        %v203 = vld [vmem:[%s170 + $0x1c0] sm:$0xff]
        %v204 = vld [vmem:[%s170 + $0x1d0] sm:$0x1f]
        %v205 = vld [vmem:[%s170 + $0x1e0] sm:$0xff]
        %v206 = vld [vmem:[%s170 + $0x1f0] sm:$0xff]
        %v207 = vld [vmem:[%s170 + $0x200] sm:$0x1f]
        %v208 = vld [vmem:[%s170 + $0x210] sm:$0xff]
        %v209 = vld [vmem:[%s170 + $0x220] sm:$0xff]
        %v210 = vld [vmem:[%s170 + $0x230] sm:$0x1f]
        %v211 = vld [vmem:[%s170 + $0x240] sm:$0xff]
        %v212 = vld [vmem:[%s170 + $0x250] sm:$0xff]
        %v213 = vld [vmem:[%s170 + $0x260] sm:$0x1f]
        %v214 = vld [vmem:[%s170 + $0x270] sm:$0xff]
        %v215 = vld [vmem:[%s170 + $0x280] sm:$0xff]
        %v216 = vld [vmem:[%s170 + $0x290] sm:$0x1f]
        %v217 = vld [vmem:[%s170 + $0x2a0] sm:$0xff]
        %v218 = vld [vmem:[%s170 + $0x2b0] sm:$0xff]
        %v219 = vld [vmem:[%s170 + $0x2c0] sm:$0x1f]
        %v220 = vld [vmem:[%s170 + $0x2d0] sm:$0xff]
        %v221 = vld [vmem:[%s170 + $0x2e0] sm:$0xff]
        %v222 = vld [vmem:[%s170 + $0x2f0] sm:$0x1f]
        %v225 = vcombine.high %v173, %v173
        %v227 = vunpack.c.l.s4 1966171168
        %v228 = vunpack.c.0.s8 %v227
        %v229 = vlaneseq
        %v230 = vshrl.u32 %v229, 7
        %v231 = vsub.s32 %v228, %v230
        %v232 = vrot.slane %v173, %v231
        %v234 = vunpack.c.l.s4 1966171168
        %v235 = vunpack.c.0.s8 %v234
        %v236 = vlaneseq
        %v237 = vshrl.u32 %v236, 7
        %v238 = vsub.s32 %v235, %v237
        %v239 = vrot.slane %v225, %v238
        %v240 = vcombine.high %v232, %v232
        %v241 = vcombine.high %v239, %v239
        %v243 = vunpack.c.l.s4 1966171168
        %v244 = vunpack.c.0.s8 %v243
        %v245 = vlaneseq
        %v246 = vshrl.u32 %v245, 7
        %v247 = vsub.s32 %v244, %v246
        %v248 = vrot.slane %v232, %v247
        %v250 = vunpack.c.l.s4 1966171168
        %v251 = vunpack.c.0.s8 %v250
        %v252 = vlaneseq
        %v253 = vshrl.u32 %v252, 7
        %v254 = vsub.s32 %v251, %v253
        %v255 = vrot.slane %v239, %v254
        %v257 = vunpack.c.l.s4 1966171168
        %v258 = vunpack.c.0.s8 %v257
        %v259 = vlaneseq
        %v260 = vshrl.u32 %v259, 7
        %v261 = vsub.s32 %v258, %v260
        %v262 = vrot.slane %v240, %v261
        %v264 = vunpack.c.l.s4 1966171168
        %v265 = vunpack.c.0.s8 %v264
        %v266 = vlaneseq
        %v267 = vshrl.u32 %v266, 7
        %v268 = vsub.s32 %v265, %v267
        %v269 = vrot.slane %v241, %v268
        %v270 = vcombine.high %v248, %v248
        %v271 = vcombine.high %v255, %v255
        %v272 = vcombine.high %v262, %v262
        %v273 = vcombine.high %v269, %v269
        %v274 = vcombine.high %v174, %v174
        %v276 = vunpack.c.l.s4 1966171168
        %v277 = vunpack.c.0.s8 %v276
        %v278 = vlaneseq
        %v279 = vshrl.u32 %v278, 7
        %v280 = vsub.s32 %v277, %v279
        %v281 = vrot.slane %v174, %v280
        %v283 = vunpack.c.l.s4 1966171168
        %v284 = vunpack.c.0.s8 %v283
        %v285 = vlaneseq
        %v286 = vshrl.u32 %v285, 7
        %v287 = vsub.s32 %v284, %v286
        %v288 = vrot.slane %v274, %v287
        %v289 = vcombine.high %v281, %v281
        %v290 = vcombine.high %v288, %v288
        %v292 = vunpack.c.l.s4 1966171168
        %v293 = vunpack.c.0.s8 %v292
        %v294 = vlaneseq
        %v295 = vshrl.u32 %v294, 7
        %v296 = vsub.s32 %v293, %v295
        %v297 = vrot.slane %v281, %v296
        %v299 = vunpack.c.l.s4 1966171168
        %v300 = vunpack.c.0.s8 %v299
        %v301 = vlaneseq
        %v302 = vshrl.u32 %v301, 7
        %v303 = vsub.s32 %v300, %v302
        %v304 = vrot.slane %v288, %v303
        %v306 = vunpack.c.l.s4 1966171168
        %v307 = vunpack.c.0.s8 %v306
        %v308 = vlaneseq
        %v309 = vshrl.u32 %v308, 7
        %v310 = vsub.s32 %v307, %v309
        %v311 = vrot.slane %v289, %v310
        %v313 = vunpack.c.l.s4 1966171168
        %v314 = vunpack.c.0.s8 %v313
        %v315 = vlaneseq
        %v316 = vshrl.u32 %v315, 7
        %v317 = vsub.s32 %v314, %v316
        %v318 = vrot.slane %v290, %v317
        %v319 = vcombine.high %v297, %v297
        %v320 = vcombine.high %v304, %v304
        %v321 = vcombine.high %v311, %v311
        %v322 = vcombine.high %v318, %v318
        %v323 = vlaneseq
        %v324 = vshrl.u32 %v323, 7
        %v325 = vsub.s32 0, %v324
        %v326 = vrot.slane %v248, %v325
        %v327 = vlaneseq
        %v328 = vshrl.u32 %v327, 7
        %v329 = vsub.s32 0, %v328
        %v330 = vrot.slane %v262, %v329
        %v331 = vlaneseq
        %v332 = vshrl.u32 %v331, 7
        %v333 = vsub.s32 0, %v332
        %v334 = vrot.slane %v270, %v333
        %v335 = vlaneseq
        %v336 = vshrl.u32 %v335, 7
        %v337 = vsub.s32 0, %v336
        %v338 = vrot.slane %v272, %v337
        %v339 = vlaneseq
        %v340 = vshrl.u32 %v339, 7
        %v341 = vsub.s32 0, %v340
        %v342 = vrot.slane %v255, %v341
        %v343 = vlaneseq
        %v344 = vshrl.u32 %v343, 7
        %v345 = vsub.s32 0, %v344
        %v346 = vrot.slane %v269, %v345
        %v347 = vlaneseq
        %v348 = vshrl.u32 %v347, 7
        %v349 = vsub.s32 0, %v348
        %v350 = vrot.slane %v271, %v349
        %v351 = vlaneseq
        %v352 = vshrl.u32 %v351, 7
        %v353 = vsub.s32 0, %v352
        %v354 = vrot.slane %v273, %v353
        %v355 = vlaneseq
        %v356 = vshrl.u32 %v355, 7
        %v357 = vsub.s32 0, %v356
        %v358 = vrot.slane %v297, %v357
        %v359 = vlaneseq
        %v360 = vshrl.u32 %v359, 7
        %v361 = vsub.s32 0, %v360
        %v362 = vrot.slane %v311, %v361
        %v363 = vlaneseq
        %v364 = vshrl.u32 %v363, 7
        %v365 = vsub.s32 0, %v364
        %v366 = vrot.slane %v319, %v365
        %v367 = vlaneseq
        %v368 = vshrl.u32 %v367, 7
        %v369 = vsub.s32 0, %v368
        %v370 = vrot.slane %v321, %v369
        %v371 = vlaneseq
        %v372 = vshrl.u32 %v371, 7
        %v373 = vsub.s32 0, %v372
        %v374 = vrot.slane %v304, %v373
        %v375 = vlaneseq
        %v376 = vshrl.u32 %v375, 7
        %v377 = vsub.s32 0, %v376
        %v378 = vrot.slane %v318, %v377
        %v379 = vlaneseq
        %v380 = vshrl.u32 %v379, 7
        %v381 = vsub.s32 0, %v380
        %v382 = vrot.slane %v320, %v381
        %v383 = vlaneseq
        %v384 = vshrl.u32 %v383, 7
        %v385 = vsub.s32 0, %v384
        %v386 = vrot.slane %v322, %v385
        %v403 = vmul.f32 %v326, %v175
        %v404 = vmul.f32 %v326, %v176
        %v405 = vmul.f32 %v326, %v177
        %v406 = vmul.f32 %v330, %v178
        %v407 = vmul.f32 %v330, %v179
        %v408 = vmul.f32 %v330, %v180
        %v409 = vmul.f32 %v334, %v181
        %v410 = vmul.f32 %v334, %v182
        %v411 = vmul.f32 %v334, %v183
        %v412 = vmul.f32 %v338, %v184
        %v413 = vmul.f32 %v338, %v185
        %v414 = vmul.f32 %v338, %v186
        %v415 = vmul.f32 %v342, %v187
        %v416 = vmul.f32 %v342, %v188
        %v417 = vmul.f32 %v342, %v189
        %v418 = vmul.f32 %v346, %v190
        %v419 = vmul.f32 %v346, %v191
        %v420 = vmul.f32 %v346, %v192
        %v421 = vmul.f32 %v350, %v193
        %v422 = vmul.f32 %v350, %v194
        %v423 = vmul.f32 %v350, %v195
        %v424 = vmul.f32 %v354, %v196
        %v425 = vmul.f32 %v354, %v197
        %v426 = vmul.f32 %v354, %v198
        %v427 = vmul.f32 %v358, %v199
        %v428 = vmul.f32 %v358, %v200
        %v429 = vmul.f32 %v358, %v201
        %v430 = vmul.f32 %v362, %v202
        %v431 = vmul.f32 %v362, %v203
        %v432 = vmul.f32 %v362, %v204
        %v433 = vmul.f32 %v366, %v205
        %v434 = vmul.f32 %v366, %v206
        %v435 = vmul.f32 %v366, %v207
        %v436 = vmul.f32 %v370, %v208
        %v437 = vmul.f32 %v370, %v209
        %v438 = vmul.f32 %v370, %v210
        %v439 = vmul.f32 %v374, %v211
        %v440 = vmul.f32 %v374, %v212
        %v441 = vmul.f32 %v374, %v213
        %v442 = vmul.f32 %v378, %v214
        %v443 = vmul.f32 %v378, %v215
        %v444 = vmul.f32 %v378, %v216
        %v445 = vmul.f32 %v382, %v217
        %v446 = vmul.f32 %v382, %v218
        %v447 = vmul.f32 %v382, %v219
        %v448 = vmul.f32 %v386, %v220
        %v449 = vmul.f32 %v386, %v221
        %v450 = vmul.f32 %v386, %v222
        %v451 = vadd.f32 %v403, 0.0
        %v452 = vadd.f32 %v404, 0.0
        %v453 = vadd.f32 %v405, 0.0
        %v454 = vadd.f32 %v406, 0.0
        %v455 = vadd.f32 %v407, 0.0
        %v456 = vadd.f32 %v408, 0.0
        %v457 = vadd.f32 %v409, 0.0
        %v458 = vadd.f32 %v410, 0.0
        %v459 = vadd.f32 %v411, 0.0
        %v460 = vadd.f32 %v412, 0.0
        %v461 = vadd.f32 %v413, 0.0
        %v462 = vadd.f32 %v414, 0.0
        %v463 = vadd.f32 %v415, 0.0
        %v464 = vadd.f32 %v416, 0.0
        %v465 = vadd.f32 %v417, 0.0
        %v466 = vadd.f32 %v418, 0.0
        %v467 = vadd.f32 %v419, 0.0
        %v468 = vadd.f32 %v420, 0.0
        %v469 = vadd.f32 %v421, 0.0
        %v470 = vadd.f32 %v422, 0.0
        %v471 = vadd.f32 %v423, 0.0
        %v472 = vadd.f32 %v424, 0.0
        %v473 = vadd.f32 %v425, 0.0
        %v474 = vadd.f32 %v426, 0.0
        %v475 = vadd.f32 %v427, 0.0
        %v476 = vadd.f32 %v428, 0.0
        %v477 = vadd.f32 %v429, 0.0
        %v478 = vadd.f32 %v430, 0.0
        %v479 = vadd.f32 %v431, 0.0
        %v480 = vadd.f32 %v432, 0.0
        %v481 = vadd.f32 %v433, 0.0
        %v482 = vadd.f32 %v434, 0.0
        %v483 = vadd.f32 %v435, 0.0
        %v484 = vadd.f32 %v436, 0.0
        %v485 = vadd.f32 %v437, 0.0
        %v486 = vadd.f32 %v438, 0.0
        %v487 = vadd.f32 %v439, 0.0
        %v488 = vadd.f32 %v440, 0.0
        %v489 = vadd.f32 %v441, 0.0
        %v490 = vadd.f32 %v442, 0.0
        %v491 = vadd.f32 %v443, 0.0
        %v492 = vadd.f32 %v444, 0.0
        %v493 = vadd.f32 %v445, 0.0
        %v494 = vadd.f32 %v446, 0.0
        %v495 = vadd.f32 %v447, 0.0
        %v496 = vadd.f32 %v448, 0.0
        %v497 = vadd.f32 %v449, 0.0
        %v498 = vadd.f32 %v450, 0.0
        %v499 = vmul.f32 %v175, %v175
        %v500 = vmul.f32 %v176, %v176
        %v501 = vmul.f32 %v177, %v177
        %v502 = vmul.f32 %v178, %v178
        %v503 = vmul.f32 %v179, %v179
        %v504 = vmul.f32 %v180, %v180
        %v505 = vmul.f32 %v181, %v181
        %v506 = vmul.f32 %v182, %v182
        %v507 = vmul.f32 %v183, %v183
        %v508 = vmul.f32 %v184, %v184
        %v509 = vmul.f32 %v185, %v185
        %v510 = vmul.f32 %v186, %v186
        %v511 = vmul.f32 %v187, %v187
        %v512 = vmul.f32 %v188, %v188
        %v513 = vmul.f32 %v189, %v189
        %v514 = vmul.f32 %v190, %v190
        %v515 = vmul.f32 %v191, %v191
        %v516 = vmul.f32 %v192, %v192
        %v517 = vmul.f32 %v193, %v193
        %v518 = vmul.f32 %v194, %v194
        %v519 = vmul.f32 %v195, %v195
        %v520 = vmul.f32 %v196, %v196
        %v521 = vmul.f32 %v197, %v197
        %v522 = vmul.f32 %v198, %v198
        %v523 = vmul.f32 %v199, %v199
        %v524 = vmul.f32 %v200, %v200
        %v525 = vmul.f32 %v201, %v201
        %v526 = vmul.f32 %v202, %v202
        %v527 = vmul.f32 %v203, %v203
        %v528 = vmul.f32 %v204, %v204
        %v529 = vmul.f32 %v205, %v205
        %v530 = vmul.f32 %v206, %v206
        %v531 = vmul.f32 %v207, %v207
        %v532 = vmul.f32 %v208, %v208
        %v533 = vmul.f32 %v209, %v209
        %v534 = vmul.f32 %v210, %v210
        %v535 = vmul.f32 %v211, %v211
        %v536 = vmul.f32 %v212, %v212
        %v537 = vmul.f32 %v213, %v213
        %v538 = vmul.f32 %v214, %v214
        %v539 = vmul.f32 %v215, %v215
        %v540 = vmul.f32 %v216, %v216
        %v541 = vmul.f32 %v217, %v217
        %v542 = vmul.f32 %v218, %v218
        %v543 = vmul.f32 %v219, %v219
        %v544 = vmul.f32 %v220, %v220
        %v545 = vmul.f32 %v221, %v221
        %v546 = vmul.f32 %v222, %v222
        %v547 = vadd.f32 %v499, 0.0
        %v548 = vadd.f32 %v500, 0.0
        %v549 = vadd.f32 %v501, 0.0
        %v550 = vadd.f32 %v502, 0.0
        %v551 = vadd.f32 %v503, 0.0
        %v552 = vadd.f32 %v504, 0.0
        %v553 = vadd.f32 %v505, 0.0
        %v554 = vadd.f32 %v506, 0.0
        %v555 = vadd.f32 %v507, 0.0
        %v556 = vadd.f32 %v508, 0.0
        %v557 = vadd.f32 %v509, 0.0
        %v558 = vadd.f32 %v510, 0.0
        %v559 = vadd.f32 %v511, 0.0
        %v560 = vadd.f32 %v512, 0.0
        %v561 = vadd.f32 %v513, 0.0
        %v562 = vadd.f32 %v514, 0.0
        %v563 = vadd.f32 %v515, 0.0
        %v564 = vadd.f32 %v516, 0.0
        %v565 = vadd.f32 %v517, 0.0
        %v566 = vadd.f32 %v518, 0.0
        %v567 = vadd.f32 %v519, 0.0
        %v568 = vadd.f32 %v520, 0.0
        %v569 = vadd.f32 %v521, 0.0
        %v570 = vadd.f32 %v522, 0.0
        %v571 = vadd.f32 %v523, 0.0
        %v572 = vadd.f32 %v524, 0.0
        %v573 = vadd.f32 %v525, 0.0
        %v574 = vadd.f32 %v526, 0.0
        %v575 = vadd.f32 %v527, 0.0
        %v576 = vadd.f32 %v528, 0.0
        %v577 = vadd.f32 %v529, 0.0
        %v578 = vadd.f32 %v530, 0.0
        %v579 = vadd.f32 %v531, 0.0
        %v580 = vadd.f32 %v532, 0.0
        %v581 = vadd.f32 %v533, 0.0
        %v582 = vadd.f32 %v534, 0.0
        %v583 = vadd.f32 %v535, 0.0
        %v584 = vadd.f32 %v536, 0.0
        %v585 = vadd.f32 %v537, 0.0
        %v586 = vadd.f32 %v538, 0.0
        %v587 = vadd.f32 %v539, 0.0
        %v588 = vadd.f32 %v540, 0.0
        %v589 = vadd.f32 %v541, 0.0
        %v590 = vadd.f32 %v542, 0.0
        %v591 = vadd.f32 %v543, 0.0
        %v592 = vadd.f32 %v544, 0.0
        %v593 = vadd.f32 %v545, 0.0
        %v594 = vadd.f32 %v546, 0.0
        %v595 = vmul.f32 %v173, %v173
        %v596 = vmul.f32 %v174, %v174
        %v597 = vadd.f32 %v595, 0.0
        %v598 = vadd.f32 %v596, 0.0
        %s599 = scalar_lea.vmem %s163, 8
        %v600 = vld [vmem:[%s599] sm:$0xff]
        %v601 = vld [vmem:[%s599 + $0x10] sm:$0xff]
        %s602 = scalar_lea.vmem %s170, 8
        %v603 = vld [vmem:[%s602] sm:$0xff]
        %v604 = vld [vmem:[%s602 + $0x10] sm:$0xff]
        %v605 = vld [vmem:[%s602 + $0x20] sm:$0x1f]
        %v606 = vld [vmem:[%s602 + $0x30] sm:$0xff]
        %v607 = vld [vmem:[%s602 + $0x40] sm:$0xff]
        %v608 = vld [vmem:[%s602 + $0x50] sm:$0x1f]
        %v609 = vld [vmem:[%s602 + $0x60] sm:$0xff]
        %v610 = vld [vmem:[%s602 + $0x70] sm:$0xff]
        %v611 = vld [vmem:[%s602 + $0x80] sm:$0x1f]
        %v612 = vld [vmem:[%s602 + $0x90] sm:$0xff]
        %v613 = vld [vmem:[%s602 + $0xa0] sm:$0xff]
        %v614 = vld [vmem:[%s602 + $0xb0] sm:$0x1f]
        %v615 = vld [vmem:[%s602 + $0xc0] sm:$0xff]
        %v616 = vld [vmem:[%s602 + $0xd0] sm:$0xff]
        %v617 = vld [vmem:[%s602 + $0xe0] sm:$0x1f]
        %v618 = vld [vmem:[%s602 + $0xf0] sm:$0xff]
        %v619 = vld [vmem:[%s602 + $0x100] sm:$0xff]
        %v620 = vld [vmem:[%s602 + $0x110] sm:$0x1f]
        %v621 = vld [vmem:[%s602 + $0x120] sm:$0xff]
        %v622 = vld [vmem:[%s602 + $0x130] sm:$0xff]
        %v623 = vld [vmem:[%s602 + $0x140] sm:$0x1f]
        %v624 = vld [vmem:[%s602 + $0x150] sm:$0xff]
        %v625 = vld [vmem:[%s602 + $0x160] sm:$0xff]
        %v626 = vld [vmem:[%s602 + $0x170] sm:$0x1f]
        %v627 = vld [vmem:[%s602 + $0x180] sm:$0xff]
        %v628 = vld [vmem:[%s602 + $0x190] sm:$0xff]
        %v629 = vld [vmem:[%s602 + $0x1a0] sm:$0x1f]
        %v630 = vld [vmem:[%s602 + $0x1b0] sm:$0xff]
        %v631 = vld [vmem:[%s602 + $0x1c0] sm:$0xff]
        %v632 = vld [vmem:[%s602 + $0x1d0] sm:$0x1f]
        %v633 = vld [vmem:[%s602 + $0x1e0] sm:$0xff]
        %v634 = vld [vmem:[%s602 + $0x1f0] sm:$0xff]
        %v635 = vld [vmem:[%s602 + $0x200] sm:$0x1f]
        %v636 = vld [vmem:[%s602 + $0x210] sm:$0xff]
        %v637 = vld [vmem:[%s602 + $0x220] sm:$0xff]
        %v638 = vld [vmem:[%s602 + $0x230] sm:$0x1f]
        %v639 = vld [vmem:[%s602 + $0x240] sm:$0xff]
        %v640 = vld [vmem:[%s602 + $0x250] sm:$0xff]
        %v641 = vld [vmem:[%s602 + $0x260] sm:$0x1f]
        %v642 = vld [vmem:[%s602 + $0x270] sm:$0xff]
        %v643 = vld [vmem:[%s602 + $0x280] sm:$0xff]
        %v644 = vld [vmem:[%s602 + $0x290] sm:$0x1f]
        %v645 = vld [vmem:[%s602 + $0x2a0] sm:$0xff]
        %v646 = vld [vmem:[%s602 + $0x2b0] sm:$0xff]
        %v647 = vld [vmem:[%s602 + $0x2c0] sm:$0x1f]
        %v648 = vld [vmem:[%s602 + $0x2d0] sm:$0xff]
        %v649 = vld [vmem:[%s602 + $0x2e0] sm:$0xff]
        %v650 = vld [vmem:[%s602 + $0x2f0] sm:$0x1f]
        %v653 = vcombine.high %v600, %v600
        %v655 = vunpack.c.l.s4 1966171168
        %v656 = vunpack.c.0.s8 %v655
        %v657 = vlaneseq
        %v658 = vshrl.u32 %v657, 7
        %v659 = vsub.s32 %v656, %v658
        %v660 = vrot.slane %v600, %v659
        %v662 = vunpack.c.l.s4 1966171168
        %v663 = vunpack.c.0.s8 %v662
        %v664 = vlaneseq
        %v665 = vshrl.u32 %v664, 7
        %v666 = vsub.s32 %v663, %v665
        %v667 = vrot.slane %v653, %v666
        %v668 = vcombine.high %v660, %v660
        %v669 = vcombine.high %v667, %v667
        %v671 = vunpack.c.l.s4 1966171168
        %v672 = vunpack.c.0.s8 %v671
        %v673 = vlaneseq
        %v674 = vshrl.u32 %v673, 7
        %v675 = vsub.s32 %v672, %v674
        %v676 = vrot.slane %v660, %v675
        %v678 = vunpack.c.l.s4 1966171168
        %v679 = vunpack.c.0.s8 %v678
        %v680 = vlaneseq
        %v681 = vshrl.u32 %v680, 7
        %v682 = vsub.s32 %v679, %v681
        %v683 = vrot.slane %v667, %v682
        %v685 = vunpack.c.l.s4 1966171168
        %v686 = vunpack.c.0.s8 %v685
        %v687 = vlaneseq
        %v688 = vshrl.u32 %v687, 7
        %v689 = vsub.s32 %v686, %v688
        %v690 = vrot.slane %v668, %v689
        %v692 = vunpack.c.l.s4 1966171168
        %v693 = vunpack.c.0.s8 %v692
        %v694 = vlaneseq
        %v695 = vshrl.u32 %v694, 7
        %v696 = vsub.s32 %v693, %v695
        %v697 = vrot.slane %v669, %v696
        %v698 = vcombine.high %v676, %v676
        %v699 = vcombine.high %v683, %v683
        %v700 = vcombine.high %v690, %v690
        %v701 = vcombine.high %v697, %v697
        %v702 = vcombine.high %v601, %v601
        %v704 = vunpack.c.l.s4 1966171168
        %v705 = vunpack.c.0.s8 %v704
        %v706 = vlaneseq
        %v707 = vshrl.u32 %v706, 7
        %v708 = vsub.s32 %v705, %v707
        %v709 = vrot.slane %v601, %v708
        %v711 = vunpack.c.l.s4 1966171168
        %v712 = vunpack.c.0.s8 %v711
        %v713 = vlaneseq
        %v714 = vshrl.u32 %v713, 7
        %v715 = vsub.s32 %v712, %v714
        %v716 = vrot.slane %v702, %v715
        %v717 = vcombine.high %v709, %v709
        %v718 = vcombine.high %v716, %v716
        %v720 = vunpack.c.l.s4 1966171168
        %v721 = vunpack.c.0.s8 %v720
        %v722 = vlaneseq
        %v723 = vshrl.u32 %v722, 7
        %v724 = vsub.s32 %v721, %v723
        %v725 = vrot.slane %v709, %v724
        %v727 = vunpack.c.l.s4 1966171168
        %v728 = vunpack.c.0.s8 %v727
        %v729 = vlaneseq
        %v730 = vshrl.u32 %v729, 7
        %v731 = vsub.s32 %v728, %v730
        %v732 = vrot.slane %v716, %v731
        %v734 = vunpack.c.l.s4 1966171168
        %v735 = vunpack.c.0.s8 %v734
        %v736 = vlaneseq
        %v737 = vshrl.u32 %v736, 7
        %v738 = vsub.s32 %v735, %v737
        %v739 = vrot.slane %v717, %v738
        %v741 = vunpack.c.l.s4 1966171168
        %v742 = vunpack.c.0.s8 %v741
        %v743 = vlaneseq
        %v744 = vshrl.u32 %v743, 7
        %v745 = vsub.s32 %v742, %v744
        %v746 = vrot.slane %v718, %v745
        %v747 = vcombine.high %v725, %v725
        %v748 = vcombine.high %v732, %v732
        %v749 = vcombine.high %v739, %v739
        %v750 = vcombine.high %v746, %v746
        %v751 = vlaneseq
        %v752 = vshrl.u32 %v751, 7
        %v753 = vsub.s32 0, %v752
        %v754 = vrot.slane %v676, %v753
        %v755 = vlaneseq
        %v756 = vshrl.u32 %v755, 7
        %v757 = vsub.s32 0, %v756
        %v758 = vrot.slane %v690, %v757
        %v759 = vlaneseq
        %v760 = vshrl.u32 %v759, 7
        %v761 = vsub.s32 0, %v760
        %v762 = vrot.slane %v698, %v761
        %v763 = vlaneseq
        %v764 = vshrl.u32 %v763, 7
        %v765 = vsub.s32 0, %v764
        %v766 = vrot.slane %v700, %v765
        %v767 = vlaneseq
        %v768 = vshrl.u32 %v767, 7
        %v769 = vsub.s32 0, %v768
        %v770 = vrot.slane %v683, %v769
        %v771 = vlaneseq
        %v772 = vshrl.u32 %v771, 7
        %v773 = vsub.s32 0, %v772
        %v774 = vrot.slane %v697, %v773
        %v775 = vlaneseq
        %v776 = vshrl.u32 %v775, 7
        %v777 = vsub.s32 0, %v776
        %v778 = vrot.slane %v699, %v777
        %v779 = vlaneseq
        %v780 = vshrl.u32 %v779, 7
        %v781 = vsub.s32 0, %v780
        %v782 = vrot.slane %v701, %v781
        %v783 = vlaneseq
        %v784 = vshrl.u32 %v783, 7
        %v785 = vsub.s32 0, %v784
        %v786 = vrot.slane %v725, %v785
        %v787 = vlaneseq
        %v788 = vshrl.u32 %v787, 7
        %v789 = vsub.s32 0, %v788
        %v790 = vrot.slane %v739, %v789
        %v791 = vlaneseq
        %v792 = vshrl.u32 %v791, 7
        %v793 = vsub.s32 0, %v792
        %v794 = vrot.slane %v747, %v793
        %v795 = vlaneseq
        %v796 = vshrl.u32 %v795, 7
        %v797 = vsub.s32 0, %v796
        %v798 = vrot.slane %v749, %v797
        %v799 = vlaneseq
        %v800 = vshrl.u32 %v799, 7
        %v801 = vsub.s32 0, %v800
        %v802 = vrot.slane %v732, %v801
        %v803 = vlaneseq
        %v804 = vshrl.u32 %v803, 7
        %v805 = vsub.s32 0, %v804
        %v806 = vrot.slane %v746, %v805
        %v807 = vlaneseq
        %v808 = vshrl.u32 %v807, 7
        %v809 = vsub.s32 0, %v808
        %v810 = vrot.slane %v748, %v809
        %v811 = vlaneseq
        %v812 = vshrl.u32 %v811, 7
        %v813 = vsub.s32 0, %v812
        %v814 = vrot.slane %v750, %v813
        %v831 = vmul.f32 %v754, %v603
        %v832 = vmul.f32 %v754, %v604
        %v833 = vmul.f32 %v754, %v605
        %v834 = vmul.f32 %v758, %v606
        %v835 = vmul.f32 %v758, %v607
        %v836 = vmul.f32 %v758, %v608
        %v837 = vmul.f32 %v762, %v609
        %v838 = vmul.f32 %v762, %v610
        %v839 = vmul.f32 %v762, %v611
        %v840 = vmul.f32 %v766, %v612
        %v841 = vmul.f32 %v766, %v613
        %v842 = vmul.f32 %v766, %v614
        %v843 = vmul.f32 %v770, %v615
        %v844 = vmul.f32 %v770, %v616
        %v845 = vmul.f32 %v770, %v617
        %v846 = vmul.f32 %v774, %v618
        %v847 = vmul.f32 %v774, %v619
        %v848 = vmul.f32 %v774, %v620
        %v849 = vmul.f32 %v778, %v621
        %v850 = vmul.f32 %v778, %v622
        %v851 = vmul.f32 %v778, %v623
        %v852 = vmul.f32 %v782, %v624
        %v853 = vmul.f32 %v782, %v625
        %v854 = vmul.f32 %v782, %v626
        %v855 = vmul.f32 %v786, %v627
        %v856 = vmul.f32 %v786, %v628
        %v857 = vmul.f32 %v786, %v629
        %v858 = vmul.f32 %v790, %v630
        %v859 = vmul.f32 %v790, %v631
        %v860 = vmul.f32 %v790, %v632
        %v861 = vmul.f32 %v794, %v633
        %v862 = vmul.f32 %v794, %v634
        %v863 = vmul.f32 %v794, %v635
        %v864 = vmul.f32 %v798, %v636
        %v865 = vmul.f32 %v798, %v637
        %v866 = vmul.f32 %v798, %v638
        %v867 = vmul.f32 %v802, %v639
        %v868 = vmul.f32 %v802, %v640
        %v869 = vmul.f32 %v802, %v641
        %v870 = vmul.f32 %v806, %v642
        %v871 = vmul.f32 %v806, %v643
        %v872 = vmul.f32 %v806, %v644
        %v873 = vmul.f32 %v810, %v645
        %v874 = vmul.f32 %v810, %v646
        %v875 = vmul.f32 %v810, %v647
        %v876 = vmul.f32 %v814, %v648
        %v877 = vmul.f32 %v814, %v649
        %v878 = vmul.f32 %v814, %v650
        %v879 = vadd.f32 %v451, %v831
        %v880 = vadd.f32 %v452, %v832
        %v881 = vadd.f32 %v453, %v833
        %v882 = vadd.f32 %v454, %v834
        %v883 = vadd.f32 %v455, %v835
        %v884 = vadd.f32 %v456, %v836
        %v885 = vadd.f32 %v457, %v837
        %v886 = vadd.f32 %v458, %v838
        %v887 = vadd.f32 %v459, %v839
        %v888 = vadd.f32 %v460, %v840
        %v889 = vadd.f32 %v461, %v841
        %v890 = vadd.f32 %v462, %v842
        %v891 = vadd.f32 %v463, %v843
        %v892 = vadd.f32 %v464, %v844
        %v893 = vadd.f32 %v465, %v845
        %v894 = vadd.f32 %v466, %v846
        %v895 = vadd.f32 %v467, %v847
        %v896 = vadd.f32 %v468, %v848
        %v897 = vadd.f32 %v469, %v849
        %v898 = vadd.f32 %v470, %v850
        %v899 = vadd.f32 %v471, %v851
        %v900 = vadd.f32 %v472, %v852
        %v901 = vadd.f32 %v473, %v853
        %v902 = vadd.f32 %v474, %v854
        %v903 = vadd.f32 %v475, %v855
        %v904 = vadd.f32 %v476, %v856
        %v905 = vadd.f32 %v477, %v857
        %v906 = vadd.f32 %v478, %v858
        %v907 = vadd.f32 %v479, %v859
        %v908 = vadd.f32 %v480, %v860
        %v909 = vadd.f32 %v481, %v861
        %v910 = vadd.f32 %v482, %v862
        %v911 = vadd.f32 %v483, %v863
        %v912 = vadd.f32 %v484, %v864
        %v913 = vadd.f32 %v485, %v865
        %v914 = vadd.f32 %v486, %v866
        %v915 = vadd.f32 %v487, %v867
        %v916 = vadd.f32 %v488, %v868
        %v917 = vadd.f32 %v489, %v869
        %v918 = vadd.f32 %v490, %v870
        %v919 = vadd.f32 %v491, %v871
        %v920 = vadd.f32 %v492, %v872
        %v921 = vadd.f32 %v493, %v873
        %v922 = vadd.f32 %v494, %v874
        %v923 = vadd.f32 %v495, %v875
        %v924 = vadd.f32 %v496, %v876
        %v925 = vadd.f32 %v497, %v877
        %v926 = vadd.f32 %v498, %v878
        %v927 = vmul.f32 %v603, %v603
        %v928 = vmul.f32 %v604, %v604
        %v929 = vmul.f32 %v605, %v605
        %v930 = vmul.f32 %v606, %v606
        %v931 = vmul.f32 %v607, %v607
        %v932 = vmul.f32 %v608, %v608
        %v933 = vmul.f32 %v609, %v609
        %v934 = vmul.f32 %v610, %v610
        %v935 = vmul.f32 %v611, %v611
        %v936 = vmul.f32 %v612, %v612
        %v937 = vmul.f32 %v613, %v613
        %v938 = vmul.f32 %v614, %v614
        %v939 = vmul.f32 %v615, %v615
        %v940 = vmul.f32 %v616, %v616
        %v941 = vmul.f32 %v617, %v617
        %v942 = vmul.f32 %v618, %v618
        %v943 = vmul.f32 %v619, %v619
        %v944 = vmul.f32 %v620, %v620
        %v945 = vmul.f32 %v621, %v621
        %v946 = vmul.f32 %v622, %v622
        %v947 = vmul.f32 %v623, %v623
        %v948 = vmul.f32 %v624, %v624
        %v949 = vmul.f32 %v625, %v625
        %v950 = vmul.f32 %v626, %v626
        %v951 = vmul.f32 %v627, %v627
        %v952 = vmul.f32 %v628, %v628
        %v953 = vmul.f32 %v629, %v629
        %v954 = vmul.f32 %v630, %v630
        %v955 = vmul.f32 %v631, %v631
        %v956 = vmul.f32 %v632, %v632
        %v957 = vmul.f32 %v633, %v633
        %v958 = vmul.f32 %v634, %v634
        %v959 = vmul.f32 %v635, %v635
        %v960 = vmul.f32 %v636, %v636
        %v961 = vmul.f32 %v637, %v637
        %v962 = vmul.f32 %v638, %v638
        %v963 = vmul.f32 %v639, %v639
        %v964 = vmul.f32 %v640, %v640
        %v965 = vmul.f32 %v641, %v641
        %v966 = vmul.f32 %v642, %v642
        %v967 = vmul.f32 %v643, %v643
        %v968 = vmul.f32 %v644, %v644
        %v969 = vmul.f32 %v645, %v645
        %v970 = vmul.f32 %v646, %v646
        %v971 = vmul.f32 %v647, %v647
        %v972 = vmul.f32 %v648, %v648
        %v973 = vmul.f32 %v649, %v649
        %v974 = vmul.f32 %v650, %v650
        %v975 = vadd.f32 %v547, %v927
        %v976 = vadd.f32 %v548, %v928
        %v977 = vadd.f32 %v549, %v929
        %v978 = vadd.f32 %v550, %v930
        %v979 = vadd.f32 %v551, %v931
        %v980 = vadd.f32 %v552, %v932
        %v981 = vadd.f32 %v553, %v933
        %v982 = vadd.f32 %v554, %v934
        %v983 = vadd.f32 %v555, %v935
        %v984 = vadd.f32 %v556, %v936
        %v985 = vadd.f32 %v557, %v937
        %v986 = vadd.f32 %v558, %v938
        %v987 = vadd.f32 %v559, %v939
        %v988 = vadd.f32 %v560, %v940
        %v989 = vadd.f32 %v561, %v941
        %v990 = vadd.f32 %v562, %v942
        %v991 = vadd.f32 %v563, %v943
        %v992 = vadd.f32 %v564, %v944
        %v993 = vadd.f32 %v565, %v945
        %v994 = vadd.f32 %v566, %v946
        %v995 = vadd.f32 %v567, %v947
        %v996 = vadd.f32 %v568, %v948
        %v997 = vadd.f32 %v569, %v949
        %v998 = vadd.f32 %v570, %v950
        %v999 = vadd.f32 %v571, %v951
        %v1000 = vadd.f32 %v572, %v952
        %v1001 = vadd.f32 %v573, %v953
        %v1002 = vadd.f32 %v574, %v954
        %v1003 = vadd.f32 %v575, %v955
        %v1004 = vadd.f32 %v576, %v956
        %v1005 = vadd.f32 %v577, %v957
        %v1006 = vadd.f32 %v578, %v958
        %v1007 = vadd.f32 %v579, %v959
        %v1008 = vadd.f32 %v580, %v960
        %v1009 = vadd.f32 %v581, %v961
        %v1010 = vadd.f32 %v582, %v962
        %v1011 = vadd.f32 %v583, %v963
        %v1012 = vadd.f32 %v584, %v964
        %v1013 = vadd.f32 %v585, %v965
        %v1014 = vadd.f32 %v586, %v966
        %v1015 = vadd.f32 %v587, %v967
        %v1016 = vadd.f32 %v588, %v968
        %v1017 = vadd.f32 %v589, %v969
        %v1018 = vadd.f32 %v590, %v970
        %v1019 = vadd.f32 %v591, %v971
        %v1020 = vadd.f32 %v592, %v972
        %v1021 = vadd.f32 %v593, %v973
        %v1022 = vadd.f32 %v594, %v974
        %v1023 = vmul.f32 %v600, %v600
        %v1024 = vmul.f32 %v601, %v601
        %v1025 = vadd.f32 %v597, %v1023
        %v1026 = vadd.f32 %v598, %v1024
        %1027 = vadd.xlane.f32.xlu0 %v879
        %v1028 = vpop.xlane.xlu0 %1027
        %1029 = vadd.xlane.f32.xlu0 %v880
        %v1030 = vpop.xlane.xlu0 %1029
        %vm1031 = vcmask 1044480
        %v1032 = vsel %vm1031, %v881, 0.0
        %1033 = vadd.xlane.f32.xlu0 %v1032
        %v1034 = vpop.xlane.xlu0 %1033
        %1035 = vadd.xlane.f32.xlu0 %v882
        %v1036 = vpop.xlane.xlu0 %1035
        %1037 = vadd.xlane.f32.xlu0 %v883
        %v1038 = vpop.xlane.xlu0 %1037
        %v1039 = vsel %vm1031, %v884, 0.0
        %1040 = vadd.xlane.f32.xlu0 %v1039
        %v1041 = vpop.xlane.xlu0 %1040
        %1042 = vadd.xlane.f32.xlu0 %v885
        %v1043 = vpop.xlane.xlu0 %1042
        %1044 = vadd.xlane.f32.xlu0 %v886
        %v1045 = vpop.xlane.xlu0 %1044
        %v1046 = vsel %vm1031, %v887, 0.0
        %1047 = vadd.xlane.f32.xlu0 %v1046
        %v1048 = vpop.xlane.xlu0 %1047
        %1049 = vadd.xlane.f32.xlu0 %v888
        %v1050 = vpop.xlane.xlu0 %1049
        %1051 = vadd.xlane.f32.xlu0 %v889
        %v1052 = vpop.xlane.xlu0 %1051
        %v1053 = vsel %vm1031, %v890, 0.0
        %1054 = vadd.xlane.f32.xlu0 %v1053
        %v1055 = vpop.xlane.xlu0 %1054
        %1056 = vadd.xlane.f32.xlu0 %v891
        %v1057 = vpop.xlane.xlu0 %1056
        %1058 = vadd.xlane.f32.xlu0 %v892
        %v1059 = vpop.xlane.xlu0 %1058
        %v1060 = vsel %vm1031, %v893, 0.0
        %1061 = vadd.xlane.f32.xlu0 %v1060
        %v1062 = vpop.xlane.xlu0 %1061
        %1063 = vadd.xlane.f32.xlu0 %v894
        %v1064 = vpop.xlane.xlu0 %1063
        %1065 = vadd.xlane.f32.xlu0 %v895
        %v1066 = vpop.xlane.xlu0 %1065
        %v1067 = vsel %vm1031, %v896, 0.0
        %1068 = vadd.xlane.f32.xlu0 %v1067
        %v1069 = vpop.xlane.xlu0 %1068
        %1070 = vadd.xlane.f32.xlu0 %v897
        %v1071 = vpop.xlane.xlu0 %1070
        %1072 = vadd.xlane.f32.xlu0 %v898
        %v1073 = vpop.xlane.xlu0 %1072
        %v1074 = vsel %vm1031, %v899, 0.0
        %1075 = vadd.xlane.f32.xlu0 %v1074
        %v1076 = vpop.xlane.xlu0 %1075
        %1077 = vadd.xlane.f32.xlu0 %v900
        %v1078 = vpop.xlane.xlu0 %1077
        %1079 = vadd.xlane.f32.xlu0 %v901
        %v1080 = vpop.xlane.xlu0 %1079
        %v1081 = vsel %vm1031, %v902, 0.0
        %1082 = vadd.xlane.f32.xlu0 %v1081
        %v1083 = vpop.xlane.xlu0 %1082
        %1084 = vadd.xlane.f32.xlu0 %v903
        %v1085 = vpop.xlane.xlu0 %1084
        %1086 = vadd.xlane.f32.xlu0 %v904
        %v1087 = vpop.xlane.xlu0 %1086
        %v1088 = vsel %vm1031, %v905, 0.0
        %1089 = vadd.xlane.f32.xlu0 %v1088
        %v1090 = vpop.xlane.xlu0 %1089
        %1091 = vadd.xlane.f32.xlu0 %v906
        %v1092 = vpop.xlane.xlu0 %1091
        %1093 = vadd.xlane.f32.xlu0 %v907
        %v1094 = vpop.xlane.xlu0 %1093
        %v1095 = vsel %vm1031, %v908, 0.0
        %1096 = vadd.xlane.f32.xlu0 %v1095
        %v1097 = vpop.xlane.xlu0 %1096
        %1098 = vadd.xlane.f32.xlu0 %v909
        %v1099 = vpop.xlane.xlu0 %1098
        %1100 = vadd.xlane.f32.xlu0 %v910
        %v1101 = vpop.xlane.xlu0 %1100
        %v1102 = vsel %vm1031, %v911, 0.0
        %1103 = vadd.xlane.f32.xlu0 %v1102
        %v1104 = vpop.xlane.xlu0 %1103
        %1105 = vadd.xlane.f32.xlu0 %v912
        %v1106 = vpop.xlane.xlu0 %1105
        %1107 = vadd.xlane.f32.xlu0 %v913
        %v1108 = vpop.xlane.xlu0 %1107
        %v1109 = vsel %vm1031, %v914, 0.0
        %1110 = vadd.xlane.f32.xlu0 %v1109
        %v1111 = vpop.xlane.xlu0 %1110
        %1112 = vadd.xlane.f32.xlu0 %v915
        %v1113 = vpop.xlane.xlu0 %1112
        %1114 = vadd.xlane.f32.xlu0 %v916
        %v1115 = vpop.xlane.xlu0 %1114
        %v1116 = vsel %vm1031, %v917, 0.0
        %1117 = vadd.xlane.f32.xlu0 %v1116
        %v1118 = vpop.xlane.xlu0 %1117
        %1119 = vadd.xlane.f32.xlu0 %v918
        %v1120 = vpop.xlane.xlu0 %1119
        %1121 = vadd.xlane.f32.xlu0 %v919
        %v1122 = vpop.xlane.xlu0 %1121
        %v1123 = vsel %vm1031, %v920, 0.0
        %1124 = vadd.xlane.f32.xlu0 %v1123
        %v1125 = vpop.xlane.xlu0 %1124
        %1126 = vadd.xlane.f32.xlu0 %v921
        %v1127 = vpop.xlane.xlu0 %1126
        %1128 = vadd.xlane.f32.xlu0 %v922
        %v1129 = vpop.xlane.xlu0 %1128
        %v1130 = vsel %vm1031, %v923, 0.0
        %1131 = vadd.xlane.f32.xlu0 %v1130
        %v1132 = vpop.xlane.xlu0 %1131
        %1133 = vadd.xlane.f32.xlu0 %v924
        %v1134 = vpop.xlane.xlu0 %1133
        %1135 = vadd.xlane.f32.xlu0 %v925
        %v1136 = vpop.xlane.xlu0 %1135
        %v1137 = vsel %vm1031, %v926, 0.0
        %1138 = vadd.xlane.f32.xlu0 %v1137
        %v1139 = vpop.xlane.xlu0 %1138
        %1140 = vadd.xlane.f32.xlu0 %v975
        %v1141 = vpop.xlane.xlu0 %1140
        %1142 = vadd.xlane.f32.xlu0 %v976
        %v1143 = vpop.xlane.xlu0 %1142
        %v1144 = vsel %vm1031, %v977, 0.0
        %1145 = vadd.xlane.f32.xlu0 %v1144
        %v1146 = vpop.xlane.xlu0 %1145
        %1147 = vadd.xlane.f32.xlu0 %v978
        %v1148 = vpop.xlane.xlu0 %1147
        %1149 = vadd.xlane.f32.xlu0 %v979
        %v1150 = vpop.xlane.xlu0 %1149
        %v1151 = vsel %vm1031, %v980, 0.0
        %1152 = vadd.xlane.f32.xlu0 %v1151
        %v1153 = vpop.xlane.xlu0 %1152
        %1154 = vadd.xlane.f32.xlu0 %v981
        %v1155 = vpop.xlane.xlu0 %1154
        %1156 = vadd.xlane.f32.xlu0 %v982
        %v1157 = vpop.xlane.xlu0 %1156
        %v1158 = vsel %vm1031, %v983, 0.0
        %1159 = vadd.xlane.f32.xlu0 %v1158
        %v1160 = vpop.xlane.xlu0 %1159
        %1161 = vadd.xlane.f32.xlu0 %v984
        %v1162 = vpop.xlane.xlu0 %1161
        %1163 = vadd.xlane.f32.xlu0 %v985
        %v1164 = vpop.xlane.xlu0 %1163
        %v1165 = vsel %vm1031, %v986, 0.0
        %1166 = vadd.xlane.f32.xlu0 %v1165
        %v1167 = vpop.xlane.xlu0 %1166
        %1168 = vadd.xlane.f32.xlu0 %v987
        %v1169 = vpop.xlane.xlu0 %1168
        %1170 = vadd.xlane.f32.xlu0 %v988
        %v1171 = vpop.xlane.xlu0 %1170
        %v1172 = vsel %vm1031, %v989, 0.0
        %1173 = vadd.xlane.f32.xlu0 %v1172
        %v1174 = vpop.xlane.xlu0 %1173
        %1175 = vadd.xlane.f32.xlu0 %v990
        %v1176 = vpop.xlane.xlu0 %1175
        %1177 = vadd.xlane.f32.xlu0 %v991
        %v1178 = vpop.xlane.xlu0 %1177
        %v1179 = vsel %vm1031, %v992, 0.0
        %1180 = vadd.xlane.f32.xlu0 %v1179
        %v1181 = vpop.xlane.xlu0 %1180
        %1182 = vadd.xlane.f32.xlu0 %v993
        %v1183 = vpop.xlane.xlu0 %1182
        %1184 = vadd.xlane.f32.xlu0 %v994
        %v1185 = vpop.xlane.xlu0 %1184
        %v1186 = vsel %vm1031, %v995, 0.0
        %1187 = vadd.xlane.f32.xlu0 %v1186
        %v1188 = vpop.xlane.xlu0 %1187
        %1189 = vadd.xlane.f32.xlu0 %v996
        %v1190 = vpop.xlane.xlu0 %1189
        %1191 = vadd.xlane.f32.xlu0 %v997
        %v1192 = vpop.xlane.xlu0 %1191
        %v1193 = vsel %vm1031, %v998, 0.0
        %1194 = vadd.xlane.f32.xlu0 %v1193
        %v1195 = vpop.xlane.xlu0 %1194
        %1196 = vadd.xlane.f32.xlu0 %v999
        %v1197 = vpop.xlane.xlu0 %1196
        %1198 = vadd.xlane.f32.xlu0 %v1000
        %v1199 = vpop.xlane.xlu0 %1198
        %v1200 = vsel %vm1031, %v1001, 0.0
        %1201 = vadd.xlane.f32.xlu0 %v1200
        %v1202 = vpop.xlane.xlu0 %1201
        %1203 = vadd.xlane.f32.xlu0 %v1002
        %v1204 = vpop.xlane.xlu0 %1203
        %1205 = vadd.xlane.f32.xlu0 %v1003
        %v1206 = vpop.xlane.xlu0 %1205
        %v1207 = vsel %vm1031, %v1004, 0.0
        %1208 = vadd.xlane.f32.xlu0 %v1207
        %v1209 = vpop.xlane.xlu0 %1208
        %1210 = vadd.xlane.f32.xlu0 %v1005
        %v1211 = vpop.xlane.xlu0 %1210
        %1212 = vadd.xlane.f32.xlu0 %v1006
        %v1213 = vpop.xlane.xlu0 %1212
        %v1214 = vsel %vm1031, %v1007, 0.0
        %1215 = vadd.xlane.f32.xlu0 %v1214
        %v1216 = vpop.xlane.xlu0 %1215
        %1217 = vadd.xlane.f32.xlu0 %v1008
        %v1218 = vpop.xlane.xlu0 %1217
        %1219 = vadd.xlane.f32.xlu0 %v1009
        %v1220 = vpop.xlane.xlu0 %1219
        %v1221 = vsel %vm1031, %v1010, 0.0
        %1222 = vadd.xlane.f32.xlu0 %v1221
        %v1223 = vpop.xlane.xlu0 %1222
        %1224 = vadd.xlane.f32.xlu0 %v1011
        %v1225 = vpop.xlane.xlu0 %1224
        %1226 = vadd.xlane.f32.xlu0 %v1012
        %v1227 = vpop.xlane.xlu0 %1226
        %v1228 = vsel %vm1031, %v1013, 0.0
        %1229 = vadd.xlane.f32.xlu0 %v1228
        %v1230 = vpop.xlane.xlu0 %1229
        %1231 = vadd.xlane.f32.xlu0 %v1014
        %v1232 = vpop.xlane.xlu0 %1231
        %1233 = vadd.xlane.f32.xlu0 %v1015
        %v1234 = vpop.xlane.xlu0 %1233
        %v1235 = vsel %vm1031, %v1016, 0.0
        %1236 = vadd.xlane.f32.xlu0 %v1235
        %v1237 = vpop.xlane.xlu0 %1236
        %1238 = vadd.xlane.f32.xlu0 %v1017
        %v1239 = vpop.xlane.xlu0 %1238
        %1240 = vadd.xlane.f32.xlu0 %v1018
        %v1241 = vpop.xlane.xlu0 %1240
        %v1242 = vsel %vm1031, %v1019, 0.0
        %1243 = vadd.xlane.f32.xlu0 %v1242
        %v1244 = vpop.xlane.xlu0 %1243
        %1245 = vadd.xlane.f32.xlu0 %v1020
        %v1246 = vpop.xlane.xlu0 %1245
        %1247 = vadd.xlane.f32.xlu0 %v1021
        %v1248 = vpop.xlane.xlu0 %1247
        %v1249 = vsel %vm1031, %v1022, 0.0
        %1250 = vadd.xlane.f32.xlu0 %v1249
        %v1251 = vpop.xlane.xlu0 %1250
        %1252 = vadd.xlane.f32.xlu0 %v1025
        %v1253 = vpop.xlane.xlu0 %1252
        %1254 = vadd.xlane.f32.xlu0 %v1026
        %v1255 = vpop.xlane.xlu0 %1254
        %v1256 = vrsqrt.pop %v1253
        %v1257 = vrsqrt.pop %v1255
        %v1258 = vrsqrt.pop %v1141
        %v1259 = vrsqrt.pop %v1143
        %v1260 = vrsqrt.pop %v1146
        %v1261 = vrsqrt.pop %v1148
        %v1262 = vrsqrt.pop %v1150
        %v1263 = vrsqrt.pop %v1153
        %v1264 = vrsqrt.pop %v1155
        %v1265 = vrsqrt.pop %v1157
        %v1266 = vrsqrt.pop %v1160
        %v1267 = vrsqrt.pop %v1162
        %v1268 = vrsqrt.pop %v1164
        %v1269 = vrsqrt.pop %v1167
        %v1270 = vrsqrt.pop %v1169
        %v1271 = vrsqrt.pop %v1171
        %v1272 = vrsqrt.pop %v1174
        %v1273 = vrsqrt.pop %v1176
        %v1274 = vrsqrt.pop %v1178
        %v1275 = vrsqrt.pop %v1181
        %v1276 = vrsqrt.pop %v1183
        %v1277 = vrsqrt.pop %v1185
        %v1278 = vrsqrt.pop %v1188
        %v1279 = vrsqrt.pop %v1190
        %v1280 = vrsqrt.pop %v1192
        %v1281 = vrsqrt.pop %v1195
        %v1282 = vrsqrt.pop %v1197
        %v1283 = vrsqrt.pop %v1199
        %v1284 = vrsqrt.pop %v1202
        %v1285 = vrsqrt.pop %v1204
        %v1286 = vrsqrt.pop %v1206
        %v1287 = vrsqrt.pop %v1209
        %v1288 = vrsqrt.pop %v1211
        %v1289 = vrsqrt.pop %v1213
        %v1290 = vrsqrt.pop %v1216
        %v1291 = vrsqrt.pop %v1218
        %v1292 = vrsqrt.pop %v1220
        %v1293 = vrsqrt.pop %v1223
        %v1294 = vrsqrt.pop %v1225
        %v1295 = vrsqrt.pop %v1227
        %v1296 = vrsqrt.pop %v1230
        %v1297 = vrsqrt.pop %v1232
        %v1298 = vrsqrt.pop %v1234
        %v1299 = vrsqrt.pop %v1237
        %v1300 = vrsqrt.pop %v1239
        %v1301 = vrsqrt.pop %v1241
        %v1302 = vrsqrt.pop %v1244
        %v1303 = vrsqrt.pop %v1246
        %v1304 = vrsqrt.pop %v1248
        %v1305 = vrsqrt.pop %v1251
        %v1354 = vlaneseq
        %v1355 = vand.u32 %v1354, 127
        %v1356 = vlaneseq
        %v1357 = vshrl.u32 %v1356, 7
        %v1358 = vsub.s32 %v1355, %v1357
        %v1359 = vrot.slane %v1258, %v1358
        %v1360 = vadd.s32 %v1355, 4294967288
        %v1361 = vlaneseq
        %v1362 = vshrl.u32 %v1361, 7
        %v1363 = vsub.s32 %v1360, %v1362
        %v1364 = vrot.slane %v1259, %v1363
        %vm1365 = vcmask 130112
        %v1366 = vsel %vm1365, %v1364, %v1359
        %v1367 = vadd.s32 %v1355, 4294967280
        %v1368 = vlaneseq
        %v1369 = vshrl.u32 %v1368, 7
        %v1370 = vsub.s32 %v1367, %v1369
        %v1371 = vrot.slane %v1260, %v1370
        %vm1372 = vcmask 195712
        %v1373 = vsel %vm1372, %v1371, %v1366
        %v1374 = vlaneseq
        %v1375 = vshrl.u32 %v1374, 7
        %v1376 = vsub.s32 %v1355, %v1375
        %v1377 = vrot.slane %v1261, %v1376
        %v1378 = vlaneseq
        %v1379 = vshrl.u32 %v1378, 7
        %v1380 = vsub.s32 %v1360, %v1379
        %v1381 = vrot.slane %v1262, %v1380
        %v1382 = vsel %vm1365, %v1381, %v1377
        %v1383 = vlaneseq
        %v1384 = vshrl.u32 %v1383, 7
        %v1385 = vsub.s32 %v1367, %v1384
        %v1386 = vrot.slane %v1263, %v1385
        %v1387 = vsel %vm1372, %v1386, %v1382
        %v1388 = vlaneseq
        %v1389 = vshrl.u32 %v1388, 7
        %v1390 = vsub.s32 %v1355, %v1389
        %v1391 = vrot.slane %v1264, %v1390
        %v1392 = vlaneseq
        %v1393 = vshrl.u32 %v1392, 7
        %v1394 = vsub.s32 %v1360, %v1393
        %v1395 = vrot.slane %v1265, %v1394
        %v1396 = vsel %vm1365, %v1395, %v1391
        %v1397 = vlaneseq
        %v1398 = vshrl.u32 %v1397, 7
        %v1399 = vsub.s32 %v1367, %v1398
        %v1400 = vrot.slane %v1266, %v1399
        %v1401 = vsel %vm1372, %v1400, %v1396
        %v1402 = vlaneseq
        %v1403 = vshrl.u32 %v1402, 7
        %v1404 = vsub.s32 %v1355, %v1403
        %v1405 = vrot.slane %v1267, %v1404
        %v1406 = vlaneseq
        %v1407 = vshrl.u32 %v1406, 7
        %v1408 = vsub.s32 %v1360, %v1407
        %v1409 = vrot.slane %v1268, %v1408
        %v1410 = vsel %vm1365, %v1409, %v1405
        %v1411 = vlaneseq
        %v1412 = vshrl.u32 %v1411, 7
        %v1413 = vsub.s32 %v1367, %v1412
        %v1414 = vrot.slane %v1269, %v1413
        %v1415 = vsel %vm1372, %v1414, %v1410
        %v1416 = vlaneseq
        %v1417 = vshrl.u32 %v1416, 7
        %v1418 = vsub.s32 %v1355, %v1417
        %v1419 = vrot.slane %v1270, %v1418
        %v1420 = vlaneseq
        %v1421 = vshrl.u32 %v1420, 7
        %v1422 = vsub.s32 %v1360, %v1421
        %v1423 = vrot.slane %v1271, %v1422
        %v1424 = vsel %vm1365, %v1423, %v1419
        %v1425 = vlaneseq
        %v1426 = vshrl.u32 %v1425, 7
        %v1427 = vsub.s32 %v1367, %v1426
        %v1428 = vrot.slane %v1272, %v1427
        %v1429 = vsel %vm1372, %v1428, %v1424
        %v1430 = vlaneseq
        %v1431 = vshrl.u32 %v1430, 7
        %v1432 = vsub.s32 %v1355, %v1431
        %v1433 = vrot.slane %v1273, %v1432
        %v1434 = vlaneseq
        %v1435 = vshrl.u32 %v1434, 7
        %v1436 = vsub.s32 %v1360, %v1435
        %v1437 = vrot.slane %v1274, %v1436
        %v1438 = vsel %vm1365, %v1437, %v1433
        %v1439 = vlaneseq
        %v1440 = vshrl.u32 %v1439, 7
        %v1441 = vsub.s32 %v1367, %v1440
        %v1442 = vrot.slane %v1275, %v1441
        %v1443 = vsel %vm1372, %v1442, %v1438
        %v1444 = vlaneseq
        %v1445 = vshrl.u32 %v1444, 7
        %v1446 = vsub.s32 %v1355, %v1445
        %v1447 = vrot.slane %v1276, %v1446
        %v1448 = vlaneseq
        %v1449 = vshrl.u32 %v1448, 7
        %v1450 = vsub.s32 %v1360, %v1449
        %v1451 = vrot.slane %v1277, %v1450
        %v1452 = vsel %vm1365, %v1451, %v1447
        %v1453 = vlaneseq
        %v1454 = vshrl.u32 %v1453, 7
        %v1455 = vsub.s32 %v1367, %v1454
        %v1456 = vrot.slane %v1278, %v1455
        %v1457 = vsel %vm1372, %v1456, %v1452
        %v1458 = vlaneseq
        %v1459 = vshrl.u32 %v1458, 7
        %v1460 = vsub.s32 %v1355, %v1459
        %v1461 = vrot.slane %v1279, %v1460
        %v1462 = vlaneseq
        %v1463 = vshrl.u32 %v1462, 7
        %v1464 = vsub.s32 %v1360, %v1463
        %v1465 = vrot.slane %v1280, %v1464
        %v1466 = vsel %vm1365, %v1465, %v1461
        %v1467 = vlaneseq
        %v1468 = vshrl.u32 %v1467, 7
        %v1469 = vsub.s32 %v1367, %v1468
        %v1470 = vrot.slane %v1281, %v1469
        %v1471 = vsel %vm1372, %v1470, %v1466
        %v1472 = vlaneseq
        %v1473 = vshrl.u32 %v1472, 7
        %v1474 = vsub.s32 %v1355, %v1473
        %v1475 = vrot.slane %v1282, %v1474
        %v1476 = vlaneseq
        %v1477 = vshrl.u32 %v1476, 7
        %v1478 = vsub.s32 %v1360, %v1477
        %v1479 = vrot.slane %v1283, %v1478
        %v1480 = vsel %vm1365, %v1479, %v1475
        %v1481 = vlaneseq
        %v1482 = vshrl.u32 %v1481, 7
        %v1483 = vsub.s32 %v1367, %v1482
        %v1484 = vrot.slane %v1284, %v1483
        %v1485 = vsel %vm1372, %v1484, %v1480
        %v1486 = vlaneseq
        %v1487 = vshrl.u32 %v1486, 7
        %v1488 = vsub.s32 %v1355, %v1487
        %v1489 = vrot.slane %v1285, %v1488
        %v1490 = vlaneseq
        %v1491 = vshrl.u32 %v1490, 7
        %v1492 = vsub.s32 %v1360, %v1491
        %v1493 = vrot.slane %v1286, %v1492
        %v1494 = vsel %vm1365, %v1493, %v1489
        %v1495 = vlaneseq
        %v1496 = vshrl.u32 %v1495, 7
        %v1497 = vsub.s32 %v1367, %v1496
        %v1498 = vrot.slane %v1287, %v1497
        %v1499 = vsel %vm1372, %v1498, %v1494
        %v1500 = vlaneseq
        %v1501 = vshrl.u32 %v1500, 7
        %v1502 = vsub.s32 %v1355, %v1501
        %v1503 = vrot.slane %v1288, %v1502
        %v1504 = vlaneseq
        %v1505 = vshrl.u32 %v1504, 7
        %v1506 = vsub.s32 %v1360, %v1505
        %v1507 = vrot.slane %v1289, %v1506
        %v1508 = vsel %vm1365, %v1507, %v1503
        %v1509 = vlaneseq
        %v1510 = vshrl.u32 %v1509, 7
        %v1511 = vsub.s32 %v1367, %v1510
        %v1512 = vrot.slane %v1290, %v1511
        %v1513 = vsel %vm1372, %v1512, %v1508
        %v1514 = vlaneseq
        %v1515 = vshrl.u32 %v1514, 7
        %v1516 = vsub.s32 %v1355, %v1515
        %v1517 = vrot.slane %v1291, %v1516
        %v1518 = vlaneseq
        %v1519 = vshrl.u32 %v1518, 7
        %v1520 = vsub.s32 %v1360, %v1519
        %v1521 = vrot.slane %v1292, %v1520
        %v1522 = vsel %vm1365, %v1521, %v1517
        %v1523 = vlaneseq
        %v1524 = vshrl.u32 %v1523, 7
        %v1525 = vsub.s32 %v1367, %v1524
        %v1526 = vrot.slane %v1293, %v1525
        %v1527 = vsel %vm1372, %v1526, %v1522
        %v1528 = vlaneseq
        %v1529 = vshrl.u32 %v1528, 7
        %v1530 = vsub.s32 %v1355, %v1529
        %v1531 = vrot.slane %v1294, %v1530
        %v1532 = vlaneseq
        %v1533 = vshrl.u32 %v1532, 7
        %v1534 = vsub.s32 %v1360, %v1533
        %v1535 = vrot.slane %v1295, %v1534
        %v1536 = vsel %vm1365, %v1535, %v1531
        %v1537 = vlaneseq
        %v1538 = vshrl.u32 %v1537, 7
        %v1539 = vsub.s32 %v1367, %v1538
        %v1540 = vrot.slane %v1296, %v1539
        %v1541 = vsel %vm1372, %v1540, %v1536
        %v1542 = vlaneseq
        %v1543 = vshrl.u32 %v1542, 7
        %v1544 = vsub.s32 %v1355, %v1543
        %v1545 = vrot.slane %v1297, %v1544
        %v1546 = vlaneseq
        %v1547 = vshrl.u32 %v1546, 7
        %v1548 = vsub.s32 %v1360, %v1547
        %v1549 = vrot.slane %v1298, %v1548
        %v1550 = vsel %vm1365, %v1549, %v1545
        %v1551 = vlaneseq
        %v1552 = vshrl.u32 %v1551, 7
        %v1553 = vsub.s32 %v1367, %v1552
        %v1554 = vrot.slane %v1299, %v1553
        %v1555 = vsel %vm1372, %v1554, %v1550
        %v1556 = vlaneseq
        %v1557 = vshrl.u32 %v1556, 7
        %v1558 = vsub.s32 %v1355, %v1557
        %v1559 = vrot.slane %v1300, %v1558
        %v1560 = vlaneseq
        %v1561 = vshrl.u32 %v1560, 7
        %v1562 = vsub.s32 %v1360, %v1561
        %v1563 = vrot.slane %v1301, %v1562
        %v1564 = vsel %vm1365, %v1563, %v1559
        %v1565 = vlaneseq
        %v1566 = vshrl.u32 %v1565, 7
        %v1567 = vsub.s32 %v1367, %v1566
        %v1568 = vrot.slane %v1302, %v1567
        %v1569 = vsel %vm1372, %v1568, %v1564
        %v1570 = vlaneseq
        %v1571 = vshrl.u32 %v1570, 7
        %v1572 = vsub.s32 %v1355, %v1571
        %v1573 = vrot.slane %v1303, %v1572
        %v1574 = vlaneseq
        %v1575 = vshrl.u32 %v1574, 7
        %v1576 = vsub.s32 %v1360, %v1575
        %v1577 = vrot.slane %v1304, %v1576
        %v1578 = vsel %vm1365, %v1577, %v1573
        %v1579 = vlaneseq
        %v1580 = vshrl.u32 %v1579, 7
        %v1581 = vsub.s32 %v1367, %v1580
        %v1582 = vrot.slane %v1305, %v1581
        %v1583 = vsel %vm1372, %v1582, %v1578
        %vm1584 = vcmask 1041409
        %v1585 = vsel %vm1584, %v1387, %v1373
        %vm1586 = vcmask 1042434
        %v1587 = vsel %vm1586, %v1401, %v1585
        %vm1588 = vcmask 1043459
        %v1589 = vsel %vm1588, %v1415, %v1587
        %vm1590 = vcmask 1044484
        %v1591 = vsel %vm1590, %v1429, %v1589
        %vm1592 = vcmask 1045509
        %v1593 = vsel %vm1592, %v1443, %v1591
        %vm1594 = vcmask 1046534
        %v1595 = vsel %vm1594, %v1457, %v1593
        %vm1596 = vcmask 1047559
        %v1597 = vsel %vm1596, %v1471, %v1595
        %v1598 = vsel %vm1584, %v1499, %v1485
        %v1599 = vsel %vm1586, %v1513, %v1598
        %v1600 = vsel %vm1588, %v1527, %v1599
        %v1601 = vsel %vm1590, %v1541, %v1600
        %v1602 = vsel %vm1592, %v1555, %v1601
        %v1603 = vsel %vm1594, %v1569, %v1602
        %v1604 = vsel %vm1596, %v1583, %v1603
        %v1607 = vmul.f32 %v1256, %v1597
        %v1608 = vmul.f32 %v1257, %v1604
        %v1609 = vmul.f32 %v1607, 14.285714
        %v1610 = vmul.f32 %v1608, 14.285714
        %v1613 = vlaneseq
        %v1614 = vshrl.u32 %v1613, 7
        %v1615 = vsub.s32 0, %v1614
        %v1616 = vrot.slane %v1609, %v1615
        %1618 = vbcast.lane.b32.xlu0 %v1616, 256
        %v1619 = vpop.permute.xlu0 %1618
        %s1621 = sor.u32 256, 8
        %1622 = vbcast.lane.b32.xlu0 %v1616, %s1621
        %v1623 = vpop.permute.xlu0 %1622
        %s1625 = sor.u32 256, 16
        %1626 = vbcast.lane.b32.xlu0 %v1616, %s1625
        %v1627 = vpop.permute.xlu0 %1626
        %v1628 = vlaneseq
        %v1629 = vshrl.u32 %v1628, 7
        %v1630 = vsub.s32 1, %v1629
        %v1631 = vrot.slane %v1609, %v1630
        %1633 = vbcast.lane.b32.xlu0 %v1631, 256
        %v1634 = vpop.permute.xlu0 %1633
        %s1636 = sor.u32 256, 8
        %1637 = vbcast.lane.b32.xlu0 %v1631, %s1636
        %v1638 = vpop.permute.xlu0 %1637
        %s1640 = sor.u32 256, 16
        %1641 = vbcast.lane.b32.xlu0 %v1631, %s1640
        %v1642 = vpop.permute.xlu0 %1641
        %v1643 = vlaneseq
        %v1644 = vshrl.u32 %v1643, 7
        %v1645 = vsub.s32 2, %v1644
        %v1646 = vrot.slane %v1609, %v1645
        %1648 = vbcast.lane.b32.xlu0 %v1646, 256
        %v1649 = vpop.permute.xlu0 %1648
        %s1651 = sor.u32 256, 8
        %1652 = vbcast.lane.b32.xlu0 %v1646, %s1651
        %v1653 = vpop.permute.xlu0 %1652
        %s1655 = sor.u32 256, 16
        %1656 = vbcast.lane.b32.xlu0 %v1646, %s1655
        %v1657 = vpop.permute.xlu0 %1656
        %v1658 = vlaneseq
        %v1659 = vshrl.u32 %v1658, 7
        %v1660 = vsub.s32 3, %v1659
        %v1661 = vrot.slane %v1609, %v1660
        %1663 = vbcast.lane.b32.xlu0 %v1661, 256
        %v1664 = vpop.permute.xlu0 %1663
        %s1666 = sor.u32 256, 8
        %1667 = vbcast.lane.b32.xlu0 %v1661, %s1666
        %v1668 = vpop.permute.xlu0 %1667
        %s1670 = sor.u32 256, 16
        %1671 = vbcast.lane.b32.xlu0 %v1661, %s1670
        %v1672 = vpop.permute.xlu0 %1671
        %v1673 = vlaneseq
        %v1674 = vshrl.u32 %v1673, 7
        %v1675 = vsub.s32 4, %v1674
        %v1676 = vrot.slane %v1609, %v1675
        %1678 = vbcast.lane.b32.xlu0 %v1676, 256
        %v1679 = vpop.permute.xlu0 %1678
        %s1681 = sor.u32 256, 8
        %1682 = vbcast.lane.b32.xlu0 %v1676, %s1681
        %v1683 = vpop.permute.xlu0 %1682
        %s1685 = sor.u32 256, 16
        %1686 = vbcast.lane.b32.xlu0 %v1676, %s1685
        %v1687 = vpop.permute.xlu0 %1686
        %v1688 = vlaneseq
        %v1689 = vshrl.u32 %v1688, 7
        %v1690 = vsub.s32 5, %v1689
        %v1691 = vrot.slane %v1609, %v1690
        %1693 = vbcast.lane.b32.xlu0 %v1691, 256
        %v1694 = vpop.permute.xlu0 %1693
        %s1696 = sor.u32 256, 8
        %1697 = vbcast.lane.b32.xlu0 %v1691, %s1696
        %v1698 = vpop.permute.xlu0 %1697
        %s1700 = sor.u32 256, 16
        %1701 = vbcast.lane.b32.xlu0 %v1691, %s1700
        %v1702 = vpop.permute.xlu0 %1701
        %v1703 = vlaneseq
        %v1704 = vshrl.u32 %v1703, 7
        %v1705 = vsub.s32 6, %v1704
        %v1706 = vrot.slane %v1609, %v1705
        %1708 = vbcast.lane.b32.xlu0 %v1706, 256
        %v1709 = vpop.permute.xlu0 %1708
        %s1711 = sor.u32 256, 8
        %1712 = vbcast.lane.b32.xlu0 %v1706, %s1711
        %v1713 = vpop.permute.xlu0 %1712
        %s1715 = sor.u32 256, 16
        %1716 = vbcast.lane.b32.xlu0 %v1706, %s1715
        %v1717 = vpop.permute.xlu0 %1716
        %v1718 = vlaneseq
        %v1719 = vshrl.u32 %v1718, 7
        %v1720 = vsub.s32 7, %v1719
        %v1721 = vrot.slane %v1609, %v1720
        %1723 = vbcast.lane.b32.xlu0 %v1721, 256
        %v1724 = vpop.permute.xlu0 %1723
        %s1726 = sor.u32 256, 8
        %1727 = vbcast.lane.b32.xlu0 %v1721, %s1726
        %v1728 = vpop.permute.xlu0 %1727
        %s1730 = sor.u32 256, 16
        %1731 = vbcast.lane.b32.xlu0 %v1721, %s1730
        %v1732 = vpop.permute.xlu0 %1731
        %v1733 = vlaneseq
        %v1734 = vshrl.u32 %v1733, 7
        %v1735 = vsub.s32 0, %v1734
        %v1736 = vrot.slane %v1610, %v1735
        %1738 = vbcast.lane.b32.xlu0 %v1736, 256
        %v1739 = vpop.permute.xlu0 %1738
        %s1741 = sor.u32 256, 8
        %1742 = vbcast.lane.b32.xlu0 %v1736, %s1741
        %v1743 = vpop.permute.xlu0 %1742
        %s1745 = sor.u32 256, 16
        %1746 = vbcast.lane.b32.xlu0 %v1736, %s1745
        %v1747 = vpop.permute.xlu0 %1746
        %v1748 = vlaneseq
        %v1749 = vshrl.u32 %v1748, 7
        %v1750 = vsub.s32 1, %v1749
        %v1751 = vrot.slane %v1610, %v1750
        %1753 = vbcast.lane.b32.xlu0 %v1751, 256
        %v1754 = vpop.permute.xlu0 %1753
        %s1756 = sor.u32 256, 8
        %1757 = vbcast.lane.b32.xlu0 %v1751, %s1756
        %v1758 = vpop.permute.xlu0 %1757
        %s1760 = sor.u32 256, 16
        %1761 = vbcast.lane.b32.xlu0 %v1751, %s1760
        %v1762 = vpop.permute.xlu0 %1761
        %v1763 = vlaneseq
        %v1764 = vshrl.u32 %v1763, 7
        %v1765 = vsub.s32 2, %v1764
        %v1766 = vrot.slane %v1610, %v1765
        %1768 = vbcast.lane.b32.xlu0 %v1766, 256
        %v1769 = vpop.permute.xlu0 %1768
        %s1771 = sor.u32 256, 8
        %1772 = vbcast.lane.b32.xlu0 %v1766, %s1771
        %v1773 = vpop.permute.xlu0 %1772
        %s1775 = sor.u32 256, 16
        %1776 = vbcast.lane.b32.xlu0 %v1766, %s1775
        %v1777 = vpop.permute.xlu0 %1776
        %v1778 = vlaneseq
        %v1779 = vshrl.u32 %v1778, 7
        %v1780 = vsub.s32 3, %v1779
        %v1781 = vrot.slane %v1610, %v1780
        %1783 = vbcast.lane.b32.xlu0 %v1781, 256
        %v1784 = vpop.permute.xlu0 %1783
        %s1786 = sor.u32 256, 8
        %1787 = vbcast.lane.b32.xlu0 %v1781, %s1786
        %v1788 = vpop.permute.xlu0 %1787
        %s1790 = sor.u32 256, 16
        %1791 = vbcast.lane.b32.xlu0 %v1781, %s1790
        %v1792 = vpop.permute.xlu0 %1791
        %v1793 = vlaneseq
        %v1794 = vshrl.u32 %v1793, 7
        %v1795 = vsub.s32 4, %v1794
        %v1796 = vrot.slane %v1610, %v1795
        %1798 = vbcast.lane.b32.xlu0 %v1796, 256
        %v1799 = vpop.permute.xlu0 %1798
        %s1801 = sor.u32 256, 8
        %1802 = vbcast.lane.b32.xlu0 %v1796, %s1801
        %v1803 = vpop.permute.xlu0 %1802
        %s1805 = sor.u32 256, 16
        %1806 = vbcast.lane.b32.xlu0 %v1796, %s1805
        %v1807 = vpop.permute.xlu0 %1806
        %v1808 = vlaneseq
        %v1809 = vshrl.u32 %v1808, 7
        %v1810 = vsub.s32 5, %v1809
        %v1811 = vrot.slane %v1610, %v1810
        %1813 = vbcast.lane.b32.xlu0 %v1811, 256
        %v1814 = vpop.permute.xlu0 %1813
        %s1816 = sor.u32 256, 8
        %1817 = vbcast.lane.b32.xlu0 %v1811, %s1816
        %v1818 = vpop.permute.xlu0 %1817
        %s1820 = sor.u32 256, 16
        %1821 = vbcast.lane.b32.xlu0 %v1811, %s1820
        %v1822 = vpop.permute.xlu0 %1821
        %v1823 = vlaneseq
        %v1824 = vshrl.u32 %v1823, 7
        %v1825 = vsub.s32 6, %v1824
        %v1826 = vrot.slane %v1610, %v1825
        %1828 = vbcast.lane.b32.xlu0 %v1826, 256
        %v1829 = vpop.permute.xlu0 %1828
        %s1831 = sor.u32 256, 8
        %1832 = vbcast.lane.b32.xlu0 %v1826, %s1831
        %v1833 = vpop.permute.xlu0 %1832
        %s1835 = sor.u32 256, 16
        %1836 = vbcast.lane.b32.xlu0 %v1826, %s1835
        %v1837 = vpop.permute.xlu0 %1836
        %v1838 = vlaneseq
        %v1839 = vshrl.u32 %v1838, 7
        %v1840 = vsub.s32 7, %v1839
        %v1841 = vrot.slane %v1610, %v1840
        %1843 = vbcast.lane.b32.xlu0 %v1841, 256
        %v1844 = vpop.permute.xlu0 %1843
        %s1846 = sor.u32 256, 8
        %1847 = vbcast.lane.b32.xlu0 %v1841, %s1846
        %v1848 = vpop.permute.xlu0 %1847
        %s1850 = sor.u32 256, 16
        %1851 = vbcast.lane.b32.xlu0 %v1841, %s1850
        %v1852 = vpop.permute.xlu0 %1851
        %v1901 = vmul.f32 %v1028, %v1619
        %v1902 = vmul.f32 %v1030, %v1623
        %v1903 = vmul.f32 %v1034, %v1627
        %v1904 = vmul.f32 %v1036, %v1634
        %v1905 = vmul.f32 %v1038, %v1638
        %v1906 = vmul.f32 %v1041, %v1642
        %v1907 = vmul.f32 %v1043, %v1649
        %v1908 = vmul.f32 %v1045, %v1653
        %v1909 = vmul.f32 %v1048, %v1657
        %v1910 = vmul.f32 %v1050, %v1664
        %v1911 = vmul.f32 %v1052, %v1668
        %v1912 = vmul.f32 %v1055, %v1672
        %v1913 = vmul.f32 %v1057, %v1679
        %v1914 = vmul.f32 %v1059, %v1683
        %v1915 = vmul.f32 %v1062, %v1687
        %v1916 = vmul.f32 %v1064, %v1694
        %v1917 = vmul.f32 %v1066, %v1698
        %v1918 = vmul.f32 %v1069, %v1702
        %v1919 = vmul.f32 %v1071, %v1709
        %v1920 = vmul.f32 %v1073, %v1713
        %v1921 = vmul.f32 %v1076, %v1717
        %v1922 = vmul.f32 %v1078, %v1724
        %v1923 = vmul.f32 %v1080, %v1728
        %v1924 = vmul.f32 %v1083, %v1732
        %v1925 = vmul.f32 %v1085, %v1739
        %v1926 = vmul.f32 %v1087, %v1743
        %v1927 = vmul.f32 %v1090, %v1747
        %v1928 = vmul.f32 %v1092, %v1754
        %v1929 = vmul.f32 %v1094, %v1758
        %v1930 = vmul.f32 %v1097, %v1762
        %v1931 = vmul.f32 %v1099, %v1769
        %v1932 = vmul.f32 %v1101, %v1773
        %v1933 = vmul.f32 %v1104, %v1777
        %v1934 = vmul.f32 %v1106, %v1784
        %v1935 = vmul.f32 %v1108, %v1788
        %v1936 = vmul.f32 %v1111, %v1792
        %v1937 = vmul.f32 %v1113, %v1799
        %v1938 = vmul.f32 %v1115, %v1803
        %v1939 = vmul.f32 %v1118, %v1807
        %v1940 = vmul.f32 %v1120, %v1814
        %v1941 = vmul.f32 %v1122, %v1818
        %v1942 = vmul.f32 %v1125, %v1822
        %v1943 = vmul.f32 %v1127, %v1829
        %v1944 = vmul.f32 %v1129, %v1833
        %v1945 = vmul.f32 %v1132, %v1837
        %v1946 = vmul.f32 %v1134, %v1844
        %v1947 = vmul.f32 %v1136, %v1848
        %v1948 = vmul.f32 %v1139, %v1852
        %1949 = vst [vmem:[%s157] sm:$0xff] 0.0
        %1950 = vst [vmem:[%s157 + $0x8] sm:$0xff] 0.0
        %1999 = vset.pattern.permute.xlu0 0
        %2000 = vperm.xlu0 %1999, %v1901
        %v2001 = vpop.permute.xlu0 %2000
        %2002 = vset.pattern.permute.xlu0 0
        %2003 = vperm.xlu0 %2002, %v1902
        %v2004 = vpop.permute.xlu0 %2003
        %2005 = vset.pattern.permute.xlu0 0
        %2006 = vperm.xlu0 %2005, %v1903
        %v2007 = vpop.permute.xlu0 %2006
        %2008 = vset.pattern.permute.xlu0 0
        %2009 = vperm.xlu0 %2008, %v1904
        %v2010 = vpop.permute.xlu0 %2009
        %2011 = vset.pattern.permute.xlu0 0
        %2012 = vperm.xlu0 %2011, %v1905
        %v2013 = vpop.permute.xlu0 %2012
        %2014 = vset.pattern.permute.xlu0 0
        %2015 = vperm.xlu0 %2014, %v1906
        %v2016 = vpop.permute.xlu0 %2015
        %2017 = vset.pattern.permute.xlu0 0
        %2018 = vperm.xlu0 %2017, %v1907
        %v2019 = vpop.permute.xlu0 %2018
        %2020 = vset.pattern.permute.xlu0 0
        %2021 = vperm.xlu0 %2020, %v1908
        %v2022 = vpop.permute.xlu0 %2021
        %2023 = vset.pattern.permute.xlu0 0
        %2024 = vperm.xlu0 %2023, %v1909
        %v2025 = vpop.permute.xlu0 %2024
        %2026 = vset.pattern.permute.xlu0 0
        %2027 = vperm.xlu0 %2026, %v1910
        %v2028 = vpop.permute.xlu0 %2027
        %2029 = vset.pattern.permute.xlu0 0
        %2030 = vperm.xlu0 %2029, %v1911
        %v2031 = vpop.permute.xlu0 %2030
        %2032 = vset.pattern.permute.xlu0 0
        %2033 = vperm.xlu0 %2032, %v1912
        %v2034 = vpop.permute.xlu0 %2033
        %2035 = vset.pattern.permute.xlu0 0
        %2036 = vperm.xlu0 %2035, %v1913
        %v2037 = vpop.permute.xlu0 %2036
        %2038 = vset.pattern.permute.xlu0 0
        %2039 = vperm.xlu0 %2038, %v1914
        %v2040 = vpop.permute.xlu0 %2039
        %2041 = vset.pattern.permute.xlu0 0
        %2042 = vperm.xlu0 %2041, %v1915
        %v2043 = vpop.permute.xlu0 %2042
        %2044 = vset.pattern.permute.xlu0 0
        %2045 = vperm.xlu0 %2044, %v1916
        %v2046 = vpop.permute.xlu0 %2045
        %2047 = vset.pattern.permute.xlu0 0
        %2048 = vperm.xlu0 %2047, %v1917
        %v2049 = vpop.permute.xlu0 %2048
        %2050 = vset.pattern.permute.xlu0 0
        %2051 = vperm.xlu0 %2050, %v1918
        %v2052 = vpop.permute.xlu0 %2051
        %2053 = vset.pattern.permute.xlu0 0
        %2054 = vperm.xlu0 %2053, %v1919
        %v2055 = vpop.permute.xlu0 %2054
        %2056 = vset.pattern.permute.xlu0 0
        %2057 = vperm.xlu0 %2056, %v1920
        %v2058 = vpop.permute.xlu0 %2057
        %2059 = vset.pattern.permute.xlu0 0
        %2060 = vperm.xlu0 %2059, %v1921
        %v2061 = vpop.permute.xlu0 %2060
        %2062 = vset.pattern.permute.xlu0 0
        %2063 = vperm.xlu0 %2062, %v1922
        %v2064 = vpop.permute.xlu0 %2063
        %2065 = vset.pattern.permute.xlu0 0
        %2066 = vperm.xlu0 %2065, %v1923
        %v2067 = vpop.permute.xlu0 %2066
        %2068 = vset.pattern.permute.xlu0 0
        %2069 = vperm.xlu0 %2068, %v1924
        %v2070 = vpop.permute.xlu0 %2069
        %2071 = vset.pattern.permute.xlu0 0
        %2072 = vperm.xlu0 %2071, %v1925
        %v2073 = vpop.permute.xlu0 %2072
        %2074 = vset.pattern.permute.xlu0 0
        %2075 = vperm.xlu0 %2074, %v1926
        %v2076 = vpop.permute.xlu0 %2075
        %2077 = vset.pattern.permute.xlu0 0
        %2078 = vperm.xlu0 %2077, %v1927
        %v2079 = vpop.permute.xlu0 %2078
        %2080 = vset.pattern.permute.xlu0 0
        %2081 = vperm.xlu0 %2080, %v1928
        %v2082 = vpop.permute.xlu0 %2081
        %2083 = vset.pattern.permute.xlu0 0
        %2084 = vperm.xlu0 %2083, %v1929
        %v2085 = vpop.permute.xlu0 %2084
        %2086 = vset.pattern.permute.xlu0 0
        %2087 = vperm.xlu0 %2086, %v1930
        %v2088 = vpop.permute.xlu0 %2087
        %2089 = vset.pattern.permute.xlu0 0
        %2090 = vperm.xlu0 %2089, %v1931
        %v2091 = vpop.permute.xlu0 %2090
        %2092 = vset.pattern.permute.xlu0 0
        %2093 = vperm.xlu0 %2092, %v1932
        %v2094 = vpop.permute.xlu0 %2093
        %2095 = vset.pattern.permute.xlu0 0
        %2096 = vperm.xlu0 %2095, %v1933
        %v2097 = vpop.permute.xlu0 %2096
        %2098 = vset.pattern.permute.xlu0 0
        %2099 = vperm.xlu0 %2098, %v1934
        %v2100 = vpop.permute.xlu0 %2099
        %2101 = vset.pattern.permute.xlu0 0
        %2102 = vperm.xlu0 %2101, %v1935
        %v2103 = vpop.permute.xlu0 %2102
        %2104 = vset.pattern.permute.xlu0 0
        %2105 = vperm.xlu0 %2104, %v1936
        %v2106 = vpop.permute.xlu0 %2105
        %2107 = vset.pattern.permute.xlu0 0
        %2108 = vperm.xlu0 %2107, %v1937
        %v2109 = vpop.permute.xlu0 %2108
        %2110 = vset.pattern.permute.xlu0 0
        %2111 = vperm.xlu0 %2110, %v1938
        %v2112 = vpop.permute.xlu0 %2111
        %2113 = vset.pattern.permute.xlu0 0
        %2114 = vperm.xlu0 %2113, %v1939
        %v2115 = vpop.permute.xlu0 %2114
        %2116 = vset.pattern.permute.xlu0 0
        %2117 = vperm.xlu0 %2116, %v1940
        %v2118 = vpop.permute.xlu0 %2117
        %2119 = vset.pattern.permute.xlu0 0
        %2120 = vperm.xlu0 %2119, %v1941
        %v2121 = vpop.permute.xlu0 %2120
        %2122 = vset.pattern.permute.xlu0 0
        %2123 = vperm.xlu0 %2122, %v1942
        %v2124 = vpop.permute.xlu0 %2123
        %2125 = vset.pattern.permute.xlu0 0
        %2126 = vperm.xlu0 %2125, %v1943
        %v2127 = vpop.permute.xlu0 %2126
        %2128 = vset.pattern.permute.xlu0 0
        %2129 = vperm.xlu0 %2128, %v1944
        %v2130 = vpop.permute.xlu0 %2129
        %2131 = vset.pattern.permute.xlu0 0
        %2132 = vperm.xlu0 %2131, %v1945
        %v2133 = vpop.permute.xlu0 %2132
        %2134 = vset.pattern.permute.xlu0 0
        %2135 = vperm.xlu0 %2134, %v1946
        %v2136 = vpop.permute.xlu0 %2135
        %2137 = vset.pattern.permute.xlu0 0
        %2138 = vperm.xlu0 %2137, %v1947
        %v2139 = vpop.permute.xlu0 %2138
        %2140 = vset.pattern.permute.xlu0 0
        %2141 = vperm.xlu0 %2140, %v1948
        %v2142 = vpop.permute.xlu0 %2141
        %v2143 = vlaneseq
        %v2144 = vshrl.u32 %v2143, 7
        %v2145 = vsub.s32 %v1355, %v2144
        %v2146 = vrot.slane %v2001, %v2145
        %v2147 = vlaneseq
        %v2148 = vshrl.u32 %v2147, 7
        %v2149 = vsub.s32 %v1360, %v2148
        %v2150 = vrot.slane %v2004, %v2149
        %v2151 = vsel %vm1365, %v2150, %v2146
        %v2152 = vlaneseq
        %v2153 = vshrl.u32 %v2152, 7
        %v2154 = vsub.s32 %v1367, %v2153
        %v2155 = vrot.slane %v2007, %v2154
        %v2156 = vsel %vm1372, %v2155, %v2151
        %v2157 = vlaneseq
        %v2158 = vshrl.u32 %v2157, 7
        %v2159 = vsub.s32 %v1355, %v2158
        %v2160 = vrot.slane %v2010, %v2159
        %v2161 = vlaneseq
        %v2162 = vshrl.u32 %v2161, 7
        %v2163 = vsub.s32 %v1360, %v2162
        %v2164 = vrot.slane %v2013, %v2163
        %v2165 = vsel %vm1365, %v2164, %v2160
        %v2166 = vlaneseq
        %v2167 = vshrl.u32 %v2166, 7
        %v2168 = vsub.s32 %v1367, %v2167
        %v2169 = vrot.slane %v2016, %v2168
        %v2170 = vsel %vm1372, %v2169, %v2165
        %v2171 = vlaneseq
        %v2172 = vshrl.u32 %v2171, 7
        %v2173 = vsub.s32 %v1355, %v2172
        %v2174 = vrot.slane %v2019, %v2173
        %v2175 = vlaneseq
        %v2176 = vshrl.u32 %v2175, 7
        %v2177 = vsub.s32 %v1360, %v2176
        %v2178 = vrot.slane %v2022, %v2177
        %v2179 = vsel %vm1365, %v2178, %v2174
        %v2180 = vlaneseq
        %v2181 = vshrl.u32 %v2180, 7
        %v2182 = vsub.s32 %v1367, %v2181
        %v2183 = vrot.slane %v2025, %v2182
        %v2184 = vsel %vm1372, %v2183, %v2179
        %v2185 = vlaneseq
        %v2186 = vshrl.u32 %v2185, 7
        %v2187 = vsub.s32 %v1355, %v2186
        %v2188 = vrot.slane %v2028, %v2187
        %v2189 = vlaneseq
        %v2190 = vshrl.u32 %v2189, 7
        %v2191 = vsub.s32 %v1360, %v2190
        %v2192 = vrot.slane %v2031, %v2191
        %v2193 = vsel %vm1365, %v2192, %v2188
        %v2194 = vlaneseq
        %v2195 = vshrl.u32 %v2194, 7
        %v2196 = vsub.s32 %v1367, %v2195
        %v2197 = vrot.slane %v2034, %v2196
        %v2198 = vsel %vm1372, %v2197, %v2193
        %v2199 = vlaneseq
        %v2200 = vshrl.u32 %v2199, 7
        %v2201 = vsub.s32 %v1355, %v2200
        %v2202 = vrot.slane %v2037, %v2201
        %v2203 = vlaneseq
        %v2204 = vshrl.u32 %v2203, 7
        %v2205 = vsub.s32 %v1360, %v2204
        %v2206 = vrot.slane %v2040, %v2205
        %v2207 = vsel %vm1365, %v2206, %v2202
        %v2208 = vlaneseq
        %v2209 = vshrl.u32 %v2208, 7
        %v2210 = vsub.s32 %v1367, %v2209
        %v2211 = vrot.slane %v2043, %v2210
        %v2212 = vsel %vm1372, %v2211, %v2207
        %v2213 = vlaneseq
        %v2214 = vshrl.u32 %v2213, 7
        %v2215 = vsub.s32 %v1355, %v2214
        %v2216 = vrot.slane %v2046, %v2215
        %v2217 = vlaneseq
        %v2218 = vshrl.u32 %v2217, 7
        %v2219 = vsub.s32 %v1360, %v2218
        %v2220 = vrot.slane %v2049, %v2219
        %v2221 = vsel %vm1365, %v2220, %v2216
        %v2222 = vlaneseq
        %v2223 = vshrl.u32 %v2222, 7
        %v2224 = vsub.s32 %v1367, %v2223
        %v2225 = vrot.slane %v2052, %v2224
        %v2226 = vsel %vm1372, %v2225, %v2221
        %v2227 = vlaneseq
        %v2228 = vshrl.u32 %v2227, 7
        %v2229 = vsub.s32 %v1355, %v2228
        %v2230 = vrot.slane %v2055, %v2229
        %v2231 = vlaneseq
        %v2232 = vshrl.u32 %v2231, 7
        %v2233 = vsub.s32 %v1360, %v2232
        %v2234 = vrot.slane %v2058, %v2233
        %v2235 = vsel %vm1365, %v2234, %v2230
        %v2236 = vlaneseq
        %v2237 = vshrl.u32 %v2236, 7
        %v2238 = vsub.s32 %v1367, %v2237
        %v2239 = vrot.slane %v2061, %v2238
        %v2240 = vsel %vm1372, %v2239, %v2235
        %v2241 = vlaneseq
        %v2242 = vshrl.u32 %v2241, 7
        %v2243 = vsub.s32 %v1355, %v2242
        %v2244 = vrot.slane %v2064, %v2243
        %v2245 = vlaneseq
        %v2246 = vshrl.u32 %v2245, 7
        %v2247 = vsub.s32 %v1360, %v2246
        %v2248 = vrot.slane %v2067, %v2247
        %v2249 = vsel %vm1365, %v2248, %v2244
        %v2250 = vlaneseq
        %v2251 = vshrl.u32 %v2250, 7
        %v2252 = vsub.s32 %v1367, %v2251
        %v2253 = vrot.slane %v2070, %v2252
        %v2254 = vsel %vm1372, %v2253, %v2249
        %v2255 = vlaneseq
        %v2256 = vshrl.u32 %v2255, 7
        %v2257 = vsub.s32 %v1355, %v2256
        %v2258 = vrot.slane %v2073, %v2257
        %v2259 = vlaneseq
        %v2260 = vshrl.u32 %v2259, 7
        %v2261 = vsub.s32 %v1360, %v2260
        %v2262 = vrot.slane %v2076, %v2261
        %v2263 = vsel %vm1365, %v2262, %v2258
        %v2264 = vlaneseq
        %v2265 = vshrl.u32 %v2264, 7
        %v2266 = vsub.s32 %v1367, %v2265
        %v2267 = vrot.slane %v2079, %v2266
        %v2268 = vsel %vm1372, %v2267, %v2263
        %v2269 = vlaneseq
        %v2270 = vshrl.u32 %v2269, 7
        %v2271 = vsub.s32 %v1355, %v2270
        %v2272 = vrot.slane %v2082, %v2271
        %v2273 = vlaneseq
        %v2274 = vshrl.u32 %v2273, 7
        %v2275 = vsub.s32 %v1360, %v2274
        %v2276 = vrot.slane %v2085, %v2275
        %v2277 = vsel %vm1365, %v2276, %v2272
        %v2278 = vlaneseq
        %v2279 = vshrl.u32 %v2278, 7
        %v2280 = vsub.s32 %v1367, %v2279
        %v2281 = vrot.slane %v2088, %v2280
        %v2282 = vsel %vm1372, %v2281, %v2277
        %v2283 = vlaneseq
        %v2284 = vshrl.u32 %v2283, 7
        %v2285 = vsub.s32 %v1355, %v2284
        %v2286 = vrot.slane %v2091, %v2285
        %v2287 = vlaneseq
        %v2288 = vshrl.u32 %v2287, 7
        %v2289 = vsub.s32 %v1360, %v2288
        %v2290 = vrot.slane %v2094, %v2289
        %v2291 = vsel %vm1365, %v2290, %v2286
        %v2292 = vlaneseq
        %v2293 = vshrl.u32 %v2292, 7
        %v2294 = vsub.s32 %v1367, %v2293
        %v2295 = vrot.slane %v2097, %v2294
        %v2296 = vsel %vm1372, %v2295, %v2291
        %v2297 = vlaneseq
        %v2298 = vshrl.u32 %v2297, 7
        %v2299 = vsub.s32 %v1355, %v2298
        %v2300 = vrot.slane %v2100, %v2299
        %v2301 = vlaneseq
        %v2302 = vshrl.u32 %v2301, 7
        %v2303 = vsub.s32 %v1360, %v2302
        %v2304 = vrot.slane %v2103, %v2303
        %v2305 = vsel %vm1365, %v2304, %v2300
        %v2306 = vlaneseq
        %v2307 = vshrl.u32 %v2306, 7
        %v2308 = vsub.s32 %v1367, %v2307
        %v2309 = vrot.slane %v2106, %v2308
        %v2310 = vsel %vm1372, %v2309, %v2305
        %v2311 = vlaneseq
        %v2312 = vshrl.u32 %v2311, 7
        %v2313 = vsub.s32 %v1355, %v2312
        %v2314 = vrot.slane %v2109, %v2313
        %v2315 = vlaneseq
        %v2316 = vshrl.u32 %v2315, 7
        %v2317 = vsub.s32 %v1360, %v2316
        %v2318 = vrot.slane %v2112, %v2317
        %v2319 = vsel %vm1365, %v2318, %v2314
        %v2320 = vlaneseq
        %v2321 = vshrl.u32 %v2320, 7
        %v2322 = vsub.s32 %v1367, %v2321
        %v2323 = vrot.slane %v2115, %v2322
        %v2324 = vsel %vm1372, %v2323, %v2319
        %v2325 = vlaneseq
        %v2326 = vshrl.u32 %v2325, 7
        %v2327 = vsub.s32 %v1355, %v2326
        %v2328 = vrot.slane %v2118, %v2327
        %v2329 = vlaneseq
        %v2330 = vshrl.u32 %v2329, 7
        %v2331 = vsub.s32 %v1360, %v2330
        %v2332 = vrot.slane %v2121, %v2331
        %v2333 = vsel %vm1365, %v2332, %v2328
        %v2334 = vlaneseq
        %v2335 = vshrl.u32 %v2334, 7
        %v2336 = vsub.s32 %v1367, %v2335
        %v2337 = vrot.slane %v2124, %v2336
        %v2338 = vsel %vm1372, %v2337, %v2333
        %v2339 = vlaneseq
        %v2340 = vshrl.u32 %v2339, 7
        %v2341 = vsub.s32 %v1355, %v2340
        %v2342 = vrot.slane %v2127, %v2341
        %v2343 = vlaneseq
        %v2344 = vshrl.u32 %v2343, 7
        %v2345 = vsub.s32 %v1360, %v2344
        %v2346 = vrot.slane %v2130, %v2345
        %v2347 = vsel %vm1365, %v2346, %v2342
        %v2348 = vlaneseq
        %v2349 = vshrl.u32 %v2348, 7
        %v2350 = vsub.s32 %v1367, %v2349
        %v2351 = vrot.slane %v2133, %v2350
        %v2352 = vsel %vm1372, %v2351, %v2347
        %v2353 = vlaneseq
        %v2354 = vshrl.u32 %v2353, 7
        %v2355 = vsub.s32 %v1355, %v2354
        %v2356 = vrot.slane %v2136, %v2355
        %v2357 = vlaneseq
        %v2358 = vshrl.u32 %v2357, 7
        %v2359 = vsub.s32 %v1360, %v2358
        %v2360 = vrot.slane %v2139, %v2359
        %v2361 = vsel %vm1365, %v2360, %v2356
        %v2362 = vlaneseq
        %v2363 = vshrl.u32 %v2362, 7
        %v2364 = vsub.s32 %v1367, %v2363
        %v2365 = vrot.slane %v2142, %v2364
        %v2366 = vsel %vm1372, %v2365, %v2361
        %v2367 = vsel %vm1584, %v2170, %v2156
        %v2368 = vsel %vm1586, %v2184, %v2367
        %v2369 = vsel %vm1588, %v2198, %v2368
        %v2370 = vsel %vm1590, %v2212, %v2369
        %v2371 = vsel %vm1592, %v2226, %v2370
        %v2372 = vsel %vm1594, %v2240, %v2371
        %v2373 = vsel %vm1596, %v2254, %v2372
        %v2374 = vsel %vm1584, %v2282, %v2268
        %v2375 = vsel %vm1586, %v2296, %v2374
        %v2376 = vsel %vm1588, %v2310, %v2375
        %v2377 = vsel %vm1590, %v2324, %v2376
        %v2378 = vsel %vm1592, %v2338, %v2377
        %v2379 = vsel %vm1594, %v2352, %v2378
        %v2380 = vsel %vm1596, %v2366, %v2379
        %vm2383 = vcmask 171008
        %2384 = vst.msk [vmem:[%s157] sm:$0xff] %vm2383, %v2373
        %2385 = vst.msk [vmem:[%s157 + $0x8] sm:$0xff] %vm2383, %v2380
        %s2386 = sand.u32 %s76, 1
        %s2387 = scalar_lea.sflag [#allocation3], %s2386
        %s2388 = sand.u32 %s76, 1
        %s2389 = smul.addr %s2388, 16
        %s2390 = scalar_lea.vmem [#allocation2], %s2389
        // Predicated region
        $region29: #{tpu_custom_call.1} parent=27 // pred_check
          %p2391 = pneg %p86
        $region30: #{tpu_custom_call.1} parent=27 // pred_check_branch
          %2393 = sbr.rel (%p2391) target = $region32
        $region31: #{tpu_custom_call.1} parent=27 // pred_region
          %s2394 = smul.u32 2, %s16
          %s2396 = ssub.s32 256, 256
          %2397 = vsyncadd %s2387, %s2396
          %s2398 = smul.addr %s2394, 128
          %s2399 = scalar_lea.hbm %s2, %s2398
          %s2400 = sshll.u32 %s2390, 4
          %s2401 = int_to_ptr.vmem [resolvable:$true] %s2400
          %2406 = dma.vmem_to_hbm [thread:$0]  %s2401, 256, %s2399, %s2387, 128, 128, 8
        $region32: #{tpu_custom_call.1} parent=27 // pred_fallthru
          _
      $region28: #{tpu_custom_call.1} parent=5 // pred_fallthru
        _
      %p2407 = scmp.le.s32.totalorder 2, %s11
      // Predicated region
      $region33: #{tpu_custom_call.1} parent=5 // pred_check
        %p2408 = pneg %p2407
      $region34: #{tpu_custom_call.1} parent=5 // pred_check_branch
        %2410 = sbr.rel (%p2408) target = $region36
      $region35: #{tpu_custom_call.1} parent=5 // pred_region
        %s2411 = ssub.s32 %s11, 2
        // Predicated region
        $region37: #{tpu_custom_call.1} parent=35 // pred_check
          %p2412 = pneg %p92
        $region38: #{tpu_custom_call.1} parent=35 // pred_check_branch
          %2414 = sbr.rel (%p2412) target = $region40
        $region39: #{tpu_custom_call.1} parent=35 // pred_region
          %s2415 = sand.u32 %s77, 1
          %s2416 = scalar_lea.sflag [#allocation3], %s2415
          %s2417 = sand.u32 %s77, 1
          %s2418 = smul.addr %s2417, 16
          %s2419 = scalar_lea.vmem [#allocation2], %s2418
          %2420 = dma.done %s2416, 256
        $region40: #{tpu_custom_call.1} parent=35 // pred_fallthru
          _
      $region36: #{tpu_custom_call.1} parent=5 // pred_fallthru
        _
    $region6: #{tpu_custom_call.1} parent=1 // loop_footer
      %s15 = sadd.s32 1, %s11
    $region7: #{tpu_custom_call.1} parent=1 // loop_footer_branch
      %10 = sbr.rel target = $region3
    $region8: #{tpu_custom_call.1} parent=1 // loop_exit
      _
    %2421 = vsyncpa [#allocation3], 1
    %s2422 = scalar_lea.sflag [#allocation3], 1
    %2423 = vsyncpa %s2422, 1

</llo_original>
